<compile_context>
chip_gen: v5e
topology: v5e:2x2
jax: 0.10.0
libtpu: 0.0.40
codegen_flags: <defaults>
</compile_context>

<pallas_src>
import math
import functools

import jax
import jax.numpy as jnp
from jax.experimental import pallas as pl
from jax.experimental.pallas import tpu as pltpu


def _self_attention_kernel(x_ref, wqkv_ref, wout3_ref, bout_ref, gamma_ref,
                           beta_ref, sg_ref, o_ref, *, n_head, head_dim,
                           ch_per_group, eps):
    f32 = jnp.float32
    bf16 = jnp.bfloat16

    x = x_ref[0]                                                # (S, C) f32
    S, C = x.shape

    # ---- GroupNorm: stacked per-channel sums -> one (2,C)x(C,C) group reduce ----
    # (uncentered E[x^2]-E[x]^2; fine for zero-mean activations — see note in review)
    stats = jnp.concatenate(
        [jnp.sum(x, axis=0, keepdims=True),
         jnp.sum(x * x, axis=0, keepdims=True)], axis=0)        # (2, C)
    g = jnp.dot(stats, sg_ref[...], preferred_element_type=f32,
                precision=jax.lax.Precision.HIGHEST)            # (2, C), stays f32
    n_elem = float(S * ch_per_group)
    mean = g[0:1] / n_elem                                      # (1, C)
    var = g[1:2] / n_elem - mean * mean
    inv = jax.lax.rsqrt(var + eps)
    xn = (x - mean) * inv * gamma_ref[...] + beta_ref[...]      # (S, C) f32

    # ---- qkv 1x1 conv == channel matmul (bf16 MXU operands, f32 accumulation) ----
    # weight columns pre-permuted to head-major [Q_all | K_all | V_all]; the
    # 1/sqrt(C) attention scale is pre-folded into the Q columns.
    qkv = jnp.dot(xn.astype(bf16), wqkv_ref[...],
                  preferred_element_type=f32)                   # (S, 3C) f32

    # (S, 3C) -> (3*n_head, S, head_dim): heads become a batch dim.
    qkv3 = jnp.transpose(
        qkv.astype(bf16).reshape(S, 3 * n_head, head_dim), (1, 0, 2))
    q = qkv3[:n_head]                                           # (H, S, D) bf16 (pre-scaled)
    k = qkv3[n_head:2 * n_head]                                 # (H, S, D) bf16
    v = qkv3[2 * n_head:]                                       # (H, S, D) bf16

    # ---- batched attention over spatial positions (single MXU stream per dot) ----
    s = jnp.einsum('hqd,hkd->hqk', q, k,
                   preferred_element_type=f32)                  # (H, S, S) f32
    m = jnp.max(s, axis=-1, keepdims=True)
    p = jnp.exp(s - m)                                          # unnormalized probs (f32)
    l = jnp.sum(p, axis=-1, keepdims=True)                      # (H, S, 1)
    o_un = jnp.einsum('hqk,hkd->hqd', p.astype(bf16), v,
                      preferred_element_type=f32)               # (H, S, D) f32
    attn = o_un * pl.reciprocal(l, approx=True)                 # deferred softmax norm (EUP)

    # ---- out 1x1 conv: contract (h, d) against wout reshaped to (H, D, C) ----
    yh = jnp.einsum('hqd,hdc->hqc', attn.astype(bf16), wout3_ref[...],
                    preferred_element_type=f32)                 # (H, S, C) f32
    y = jnp.sum(yh, axis=0) + bout_ref[...]                     # (S, C) f32

    # ---- residual ----
    o_ref[0] = (y + x).astype(o_ref.dtype)


def prepare_params(params, *, n_head, norm_groups):
    """One-time parameter prep (hoisted out of the per-call wrapper)."""
    wqkv = params["wqkv"]            # (3C, C)  conv1x1, no bias
    wout = params["wout"]            # (C, C)   conv1x1
    C = wout.shape[0]
    head_dim = C // n_head
    cg = C // norm_groups

    # permute qkv output channels from per-head [Qh|Kh|Vh] interleave to
    # head-major [Q_all | K_all | V_all]
    perm = []
    for part in range(3):            # 0:Q, 1:K, 2:V
        for h in range(n_head):
            base = h * 3 * head_dim + part * head_dim
            perm.extend(range(base, base + head_dim))
    perm = jnp.asarray(perm, dtype=jnp.int32)
    wqkv_t = wqkv.T[:, perm]                                    # (C, 3C) f32
    # fold the attention scale 1/sqrt(C) into the Q columns (free at prep time)
    wqkv_t = wqkv_t.at[:, :C].multiply(1.0 / math.sqrt(C))

    gid = jnp.arange(C) // cg
    sg = (gid[:, None] == gid[None, :]).astype(jnp.float32)     # (C, C) same-group

    return dict(
        wqkv_t=wqkv_t.astype(jnp.bfloat16),                              # (C, 3C)
        wout3=wout.T.reshape(n_head, head_dim, C).astype(jnp.bfloat16),  # (H, D, C)
        bout=params["bout"].reshape(1, C).astype(jnp.float32),
        gamma=params["gamma"].reshape(1, C).astype(jnp.float32),
        beta=params["beta"].reshape(1, C).astype(jnp.float32),
        sg=sg)


def self_attention_pallas(x_nchw, prep, *, n_head, norm_groups, eps=1e-5):
    B, C, H, W = x_nchw.shape
    S = H * W
    head_dim = C // n_head
    cg = C // norm_groups

    # NCHW -> (B, S, C): spatial positions on sublanes, channels lane-dense.
    x_bsc = jnp.transpose(x_nchw.reshape(B, C, S), (0, 2, 1))

    kernel = functools.partial(
        _self_attention_kernel, n_head=n_head, head_dim=head_dim,
        ch_per_group=cg, eps=eps)

    out_bsc = pl.pallas_call(
        kernel,
        out_shape=jax.ShapeDtypeStruct((B, S, C), x_nchw.dtype),
        grid_spec=pltpu.PrefetchScalarGridSpec(
            num_scalar_prefetch=0,
            grid=(B,),
            in_specs=[
                pl.BlockSpec((1, S, C), lambda b: (b, 0, 0)),             # x
                pl.BlockSpec((C, 3 * C), lambda b: (0, 0)),               # wqkv_t (bf16)
                pl.BlockSpec((n_head, head_dim, C), lambda b: (0, 0, 0)), # wout3  (bf16)
                pl.BlockSpec((1, C), lambda b: (0, 0)),                   # bout
                pl.BlockSpec((1, C), lambda b: (0, 0)),                   # gamma
                pl.BlockSpec((1, C), lambda b: (0, 0)),                   # beta
                pl.BlockSpec((C, C), lambda b: (0, 0)),                   # same-group matrix
            ],
            out_specs=pl.BlockSpec((1, S, C), lambda b: (b, 0, 0)),
        ),
        compiler_params=pltpu.CompilerParams(
            dimension_semantics=("parallel",)),
    )(x_bsc, prep["wqkv_t"], prep["wout3"], prep["bout"], prep["gamma"],
      prep["beta"], prep["sg"])

    # (B, S, C) -> NCHW
    return jnp.transpose(out_bsc, (0, 2, 1)).reshape(B, C, H, W)


def reference(x_nchw, params, *, n_head, norm_groups, eps=1e-5):
    """Pure-JAX full-precision replica of the PyTorch forward (NCHW semantics)."""
    hp = jax.lax.Precision.HIGHEST
    wqkv, wout, bout = params["wqkv"], params["wout"], params["bout"]
    gamma, beta = params["gamma"], params["beta"]
    B, C, H, W = x_nchw.shape
    hd = C // n_head

    # GroupNorm
    xg = x_nchw.reshape(B, norm_groups, C // norm_groups, H, W)
    mean = jnp.mean(xg, axis=(2, 3, 4), keepdims=True)
    var = jnp.mean((xg - mean) ** 2, axis=(2, 3, 4), keepdims=True)
    xn = (xg - mean) / jnp.sqrt(var + eps)
    xn = xn.reshape(B, C, H, W) * gamma[None, :, None, None] + beta[None, :, None, None]

    # qkv 1x1 conv
    qkv = jnp.einsum('oc,bchw->bohw', wqkv, xn, precision=hp)
    qkv = qkv.reshape(B, n_head, 3 * hd, H, W)
    q, k, v = qkv[:, :, :hd], qkv[:, :, hd:2 * hd], qkv[:, :, 2 * hd:]

    attn = jnp.einsum('bnchw,bncyx->bnhwyx', q, k, precision=hp) / math.sqrt(C)
    attn = attn.reshape(B, n_head, H, W, H * W)
    attn = jax.nn.softmax(attn, axis=-1)
    attn = attn.reshape(B, n_head, H, W, H, W)
    out = jnp.einsum('bnhwyx,bncyx->bnchw', attn, v, precision=hp)
    out = out.reshape(B, C, H, W)
    out = jnp.einsum('oc,bchw->bohw', wout, out, precision=hp) + bout[None, :, None, None]
    return out + x_nchw


if __name__ == "__main__":
    B, C, H, W = 2, 32, 8, 8
    n_head, norm_groups = 2, 8

    key = jax.random.PRNGKey(0)
    k1, k2, k3, k4, k5, k6 = jax.random.split(key, 6)
    x = jax.random.normal(k1, (B, C, H, W), jnp.float32)
    params = dict(
        wqkv=jax.random.normal(k2, (3 * C, C), jnp.float32) / math.sqrt(C),
        wout=jax.random.normal(k3, (C, C), jnp.float32) / math.sqrt(C),
        bout=0.1 * jax.random.normal(k4, (C,), jnp.float32),
        gamma=1.0 + 0.1 * jax.random.normal(k5, (C,), jnp.float32),
        beta=0.1 * jax.random.normal(k6, (C,), jnp.float32),
    )

    prep = prepare_params(params, n_head=n_head, norm_groups=norm_groups)
    out = self_attention_pallas(x, prep, n_head=n_head, norm_groups=norm_groups)
    out = jax.block_until_ready(out)

    ref = jax.block_until_ready(
        reference(x, params, n_head=n_head, norm_groups=norm_groups))
    assert out.shape == (B, C, H, W)
    max_err = float(jnp.max(jnp.abs(out - ref)))
    # bf16 MXU operands with f32 accumulation (per perf review) widen the
    # tolerance from the f32-HIGHEST 1e-3 to bf16 level.
    assert max_err < 3e-2, f"max abs error {max_err}"
    print("KERNEL_OK")
</pallas_src>

<mosaic_0001>
module attributes {stable_mosaic.version = 11 : i64} {
  func.func @_self_attention_kernel(%arg0: i32, %arg1: memref<1x64x32xf32, #tpu.memory_space<vmem>>, %arg2: memref<32x96xbf16, #tpu.memory_space<vmem>>, %arg3: memref<2x16x32xbf16, #tpu.memory_space<vmem>>, %arg4: memref<1x32xf32, #tpu.memory_space<vmem>>, %arg5: memref<1x32xf32, #tpu.memory_space<vmem>>, %arg6: memref<1x32xf32, #tpu.memory_space<vmem>>, %arg7: memref<32x32xf32, #tpu.memory_space<vmem>>, %arg8: memref<1x64x32xf32, #tpu.memory_space<vmem>>) attributes {dimension_semantics = [#tpu.dimension_semantics<parallel>], iteration_bounds = array<i64: 2>, scalar_prefetch = 0 : i64, scratch_operands = 0 : i64, tpu.core_type = #tpu.core_type<tc>, window_params = [{transform_indices = @transform_0, window_bounds = array<i64: 1, 64, 32>}, {pipeline_mode = #tpu.pipeline_mode<synchronous>, transform_indices = @transform_1, window_bounds = array<i64: 32, 96>}, {pipeline_mode = #tpu.pipeline_mode<synchronous>, transform_indices = @transform_2, window_bounds = array<i64: 2, 16, 32>}, {pipeline_mode = #tpu.pipeline_mode<synchronous>, transform_indices = @transform_3, window_bounds = array<i64: 1, 32>}, {pipeline_mode = #tpu.pipeline_mode<synchronous>, transform_indices = @transform_4, window_bounds = array<i64: 1, 32>}, {pipeline_mode = #tpu.pipeline_mode<synchronous>, transform_indices = @transform_5, window_bounds = array<i64: 1, 32>}, {pipeline_mode = #tpu.pipeline_mode<synchronous>, transform_indices = @transform_6, window_bounds = array<i64: 32, 32>}, {transform_indices = @transform_7, window_bounds = array<i64: 1, 64, 32>}]} {
    %c0 = arith.constant 0 : index
    %c0_0 = arith.constant 0 : index
    %c0_1 = arith.constant 0 : index
    %0 = vector.load %arg1[%c0, %c0_0, %c0_1] : memref<1x64x32xf32, #tpu.memory_space<vmem>>, vector<1x64x32xf32>
    %1 = vector.shape_cast %0 : vector<1x64x32xf32> to vector<64x32xf32>
    %cst = arith.constant dense<0.000000e+00> : vector<32xf32>
    %2 = vector.multi_reduction <add>, %1, %cst [0] : vector<64x32xf32> to vector<32xf32>
    %3 = vector.shape_cast %2 : vector<32xf32> to vector<1x32xf32>
    %4 = arith.mulf %1, %1 : vector<64x32xf32>
    %cst_2 = arith.constant dense<0.000000e+00> : vector<32xf32>
    %5 = vector.multi_reduction <add>, %4, %cst_2 [0] : vector<64x32xf32> to vector<32xf32>
    %6 = vector.shape_cast %5 : vector<32xf32> to vector<1x32xf32>
    %7 = tpu.concatenate %3, %6 in 0 : vector<1x32xf32>, vector<1x32xf32> -> vector<2x32xf32>
    %c0_3 = arith.constant 0 : index
    %c0_4 = arith.constant 0 : index
    %8 = vector.load %arg7[%c0_3, %c0_4] : memref<32x32xf32, #tpu.memory_space<vmem>>, vector<32x32xf32>
    %cst_5 = arith.constant dense<0.000000e+00> : vector<2x32xf32>
    %9 = tpu.matmul %7, %8, %cst_5 {dimension_numbers = #tpu.dot_dimension_numbers<[1], [0], [0], [1], [0, 0, 1, 1], [], []>, precision = #tpu.contract_precision<fp32>} : vector<2x32xf32>, vector<32x32xf32>, vector<2x32xf32> -> vector<2x32xf32>
    %10 = vector.extract_strided_slice %9 {offsets = [0, 0], sizes = [1, 32], strides = [1, 1]} : vector<2x32xf32> to vector<1x32xf32>
    %cst_6 = arith.constant 2.560000e+02 : f32
    %11 = vector.broadcast %cst_6 : f32 to vector<1x32xf32>
    %12 = arith.divf %10, %11 : vector<1x32xf32>
    %13 = vector.extract_strided_slice %9 {offsets = [1, 0], sizes = [1, 32], strides = [1, 1]} : vector<2x32xf32> to vector<1x32xf32>
    %cst_7 = arith.constant 2.560000e+02 : f32
    %14 = vector.broadcast %cst_7 : f32 to vector<1x32xf32>
    %15 = arith.divf %13, %14 : vector<1x32xf32>
    %16 = arith.mulf %12, %12 : vector<1x32xf32>
    %17 = arith.subf %15, %16 : vector<1x32xf32>
    %cst_8 = arith.constant 9.99999974E-6 : f32
    %18 = vector.broadcast %cst_8 : f32 to vector<1x32xf32>
    %19 = arith.addf %17, %18 : vector<1x32xf32>
    %20 = math.rsqrt %19 : vector<1x32xf32>
    %21 = vector.broadcast %12 : vector<1x32xf32> to vector<64x32xf32>
    %22 = arith.subf %1, %21 : vector<64x32xf32>
    %23 = vector.broadcast %20 : vector<1x32xf32> to vector<64x32xf32>
    %24 = arith.mulf %22, %23 : vector<64x32xf32>
    %c0_9 = arith.constant 0 : index
    %c0_10 = arith.constant 0 : index
    %25 = vector.load %arg5[%c0_9, %c0_10] : memref<1x32xf32, #tpu.memory_space<vmem>>, vector<1x32xf32>
    %26 = vector.broadcast %25 : vector<1x32xf32> to vector<64x32xf32>
    %27 = arith.mulf %24, %26 : vector<64x32xf32>
    %c0_11 = arith.constant 0 : index
    %c0_12 = arith.constant 0 : index
    %28 = vector.load %arg6[%c0_11, %c0_12] : memref<1x32xf32, #tpu.memory_space<vmem>>, vector<1x32xf32>
    %29 = vector.broadcast %28 : vector<1x32xf32> to vector<64x32xf32>
    %30 = arith.addf %27, %29 : vector<64x32xf32>
    %31 = arith.truncf %30 : vector<64x32xf32> to vector<64x32xbf16>
    %c0_13 = arith.constant 0 : index
    %c0_14 = arith.constant 0 : index
    %32 = vector.load %arg2[%c0_13, %c0_14] : memref<32x96xbf16, #tpu.memory_space<vmem>>, vector<32x96xbf16>
    %cst_15 = arith.constant dense<0.000000e+00> : vector<64x96xf32>
    %33 = tpu.matmul %31, %32, %cst_15 {dimension_numbers = #tpu.dot_dimension_numbers<[1], [0], [0], [1], [0, 0, 1, 1], [], []>} : vector<64x32xbf16>, vector<32x96xbf16>, vector<64x96xf32> -> vector<64x96xf32>
    %34 = arith.truncf %33 : vector<64x96xf32> to vector<64x96xbf16>
    %35 = vector.shape_cast %34 : vector<64x96xbf16> to vector<64x6x16xbf16>
    %36 = tpu.transpose %35, [1, 0, 2] : vector<64x6x16xbf16> -> vector<6x64x16xbf16>
    %37 = vector.extract_strided_slice %36 {offsets = [0, 0, 0], sizes = [2, 64, 16], strides = [1, 1, 1]} : vector<6x64x16xbf16> to vector<2x64x16xbf16>
    %38 = vector.extract_strided_slice %36 {offsets = [2, 0, 0], sizes = [2, 64, 16], strides = [1, 1, 1]} : vector<6x64x16xbf16> to vector<2x64x16xbf16>
    %39 = vector.extract_strided_slice %36 {offsets = [4, 0, 0], sizes = [2, 64, 16], strides = [1, 1, 1]} : vector<6x64x16xbf16> to vector<2x64x16xbf16>
    "tpu.trace_start"() <{level = 10 : i32, message = "hqd,hkd->hqk"}> : () -> ()
    %cst_16 = arith.constant dense<0.000000e+00> : vector<2x64x64xf32>
    %40 = tpu.matmul %37, %38, %cst_16 {dimension_numbers = #tpu.dot_dimension_numbers<[2], [2], [1], [1], [0, 0, 0, 1, 1, 1], [0], [0]>} : vector<2x64x16xbf16>, vector<2x64x16xbf16>, vector<2x64x64xf32> -> vector<2x64x64xf32>
    "tpu.trace_stop"() : () -> ()
    %cst_17 = arith.constant dense<0xFF800000> : vector<2x64xf32>
    %41 = vector.multi_reduction <maximumf>, %40, %cst_17 [2] : vector<2x64x64xf32> to vector<2x64xf32>
    %42 = vector.shape_cast %41 : vector<2x64xf32> to vector<2x64x1xf32>
    %43 = vector.broadcast %42 : vector<2x64x1xf32> to vector<2x64x64xf32>
    %44 = arith.subf %40, %43 : vector<2x64x64xf32>
    %45 = math.exp %44 : vector<2x64x64xf32>
    %cst_18 = arith.constant dense<0.000000e+00> : vector<2x64xf32>
    %46 = vector.multi_reduction <add>, %45, %cst_18 [2] : vector<2x64x64xf32> to vector<2x64xf32>
    %47 = vector.shape_cast %46 : vector<2x64xf32> to vector<2x64x1xf32>
    %48 = arith.truncf %45 : vector<2x64x64xf32> to vector<2x64x64xbf16>
    "tpu.trace_start"() <{level = 10 : i32, message = "hqk,hkd->hqd"}> : () -> ()
    %cst_19 = arith.constant dense<0.000000e+00> : vector<2x64x16xf32>
    %49 = tpu.matmul %48, %39, %cst_19 {dimension_numbers = #tpu.dot_dimension_numbers<[2], [1], [1], [2], [0, 0, 0, 1, 1, 2], [0], [0]>} : vector<2x64x64xbf16>, vector<2x64x16xbf16>, vector<2x64x16xf32> -> vector<2x64x16xf32>
    "tpu.trace_stop"() : () -> ()
    %50 = tpu.reciprocal %47 {approx = true} : vector<2x64x1xf32> -> vector<2x64x1xf32>
    %51 = vector.broadcast %50 : vector<2x64x1xf32> to vector<2x64x16xf32>
    %52 = arith.mulf %49, %51 : vector<2x64x16xf32>
    %53 = arith.truncf %52 : vector<2x64x16xf32> to vector<2x64x16xbf16>
    %c0_20 = arith.constant 0 : index
    %c0_21 = arith.constant 0 : index
    %c0_22 = arith.constant 0 : index
    %54 = vector.load %arg3[%c0_20, %c0_21, %c0_22] : memref<2x16x32xbf16, #tpu.memory_space<vmem>>, vector<2x16x32xbf16>
    "tpu.trace_start"() <{level = 10 : i32, message = "hqd,hdc->hqc"}> : () -> ()
    %cst_23 = arith.constant dense<0.000000e+00> : vector<2x64x32xf32>
    %55 = tpu.matmul %53, %54, %cst_23 {dimension_numbers = #tpu.dot_dimension_numbers<[2], [1], [1], [2], [0, 0, 0, 1, 1, 2], [0], [0]>} : vector<2x64x16xbf16>, vector<2x16x32xbf16>, vector<2x64x32xf32> -> vector<2x64x32xf32>
    "tpu.trace_stop"() : () -> ()
    %cst_24 = arith.constant dense<0.000000e+00> : vector<64x32xf32>
    %56 = vector.multi_reduction <add>, %55, %cst_24 [0] : vector<2x64x32xf32> to vector<64x32xf32>
    %c0_25 = arith.constant 0 : index
    %c0_26 = arith.constant 0 : index
    %57 = vector.load %arg4[%c0_25, %c0_26] : memref<1x32xf32, #tpu.memory_space<vmem>>, vector<1x32xf32>
    %58 = vector.broadcast %57 : vector<1x32xf32> to vector<64x32xf32>
    %59 = arith.addf %56, %58 : vector<64x32xf32>
    %60 = arith.addf %59, %1 : vector<64x32xf32>
    %c0_27 = arith.constant 0 : index
    %c0_28 = arith.constant 0 : index
    %c0_29 = arith.constant 0 : index
    %61 = vector.load %arg8[%c0_27, %c0_28, %c0_29] : memref<1x64x32xf32, #tpu.memory_space<vmem>>, vector<1x64x32xf32>
    %62 = vector.shape_cast %61 : vector<1x64x32xf32> to vector<64x32xf32>
    %63 = vector.shape_cast %60 : vector<64x32xf32> to vector<1x64x32xf32>
    tpu.vector_store %arg8[%c0_27, %c0_28, %c0_29], %63 {strides = array<i32>} : memref<1x64x32xf32, #tpu.memory_space<vmem>>, vector<1x64x32xf32>,
    return
  }
  func.func @transform_0(%arg0: i32) -> (i32, i32, i32) {
    %c0_i32 = arith.constant 0 : i32
    %c0_i32_0 = arith.constant 0 : i32
    %c0_i32_1 = arith.constant 0 : i32
    return %arg0, %c0_i32, %c0_i32_0 : i32, i32, i32
  }
  func.func @transform_1(%arg0: i32) -> (i32, i32) {
    %c0_i32 = arith.constant 0 : i32
    %c0_i32_0 = arith.constant 0 : i32
    %c0_i32_1 = arith.constant 0 : i32
    return %c0_i32, %c0_i32_0 : i32, i32
  }
  func.func @transform_2(%arg0: i32) -> (i32, i32, i32) {
    %c0_i32 = arith.constant 0 : i32
    %c0_i32_0 = arith.constant 0 : i32
    %c0_i32_1 = arith.constant 0 : i32
    %c0_i32_2 = arith.constant 0 : i32
    return %c0_i32, %c0_i32_0, %c0_i32_1 : i32, i32, i32
  }
  func.func @transform_3(%arg0: i32) -> (i32, i32) {
    %c0_i32 = arith.constant 0 : i32
    %c0_i32_0 = arith.constant 0 : i32
    %c0_i32_1 = arith.constant 0 : i32
    return %c0_i32, %c0_i32_0 : i32, i32
  }
  func.func @transform_4(%arg0: i32) -> (i32, i32) {
    %c0_i32 = arith.constant 0 : i32
    %c0_i32_0 = arith.constant 0 : i32
    %c0_i32_1 = arith.constant 0 : i32
    return %c0_i32, %c0_i32_0 : i32, i32
  }
  func.func @transform_5(%arg0: i32) -> (i32, i32) {
    %c0_i32 = arith.constant 0 : i32
    %c0_i32_0 = arith.constant 0 : i32
    %c0_i32_1 = arith.constant 0 : i32
    return %c0_i32, %c0_i32_0 : i32, i32
  }
  func.func @transform_6(%arg0: i32) -> (i32, i32) {
    %c0_i32 = arith.constant 0 : i32
    %c0_i32_0 = arith.constant 0 : i32
    %c0_i32_1 = arith.constant 0 : i32
    return %c0_i32, %c0_i32_0 : i32, i32
  }
  func.func @transform_7(%arg0: i32) -> (i32, i32, i32) {
    %c0_i32 = arith.constant 0 : i32
    %c0_i32_0 = arith.constant 0 : i32
    %c0_i32_1 = arith.constant 0 : i32
    return %arg0, %c0_i32, %c0_i32_0 : i32, i32, i32
  }
}

</mosaic_0001>

<llo_original>
// kernel: tpu_custom_call.1
$region0: #{tpu_custom_call.1}
  #allocation0 [shape = 'u32[]', space=smem, size = 0x4, offset = 0x4, fixed_abs, tag = 'smem constant byte address 0x4 - core index']
  #allocation1 [shape = 'u32[72,128]{1,0:T(1,128)}', space=vmem, size = 0x9000, scoped, tag = 'internal scratch']
  %s0 = inlined_call_operand.vmem [shape: f32[2,64,32], index: 0, kind: input, shape index: {}]
  %s1 = inlined_call_operand.vmem [shape: bf16[32,96], index: 1, kind: input, shape index: {}]
  %s2 = inlined_call_operand.vmem [shape: bf16[2,16,32], index: 2, kind: input, shape index: {}]
  %s3 = inlined_call_operand.vmem [shape: f32[1,32], index: 3, kind: input, shape index: {}]
  %s4 = inlined_call_operand.vmem [shape: f32[1,32], index: 4, kind: input, shape index: {}]
  %s5 = inlined_call_operand.vmem [shape: f32[1,32], index: 5, kind: input, shape index: {}]
  %s6 = inlined_call_operand.vmem [shape: f32[32,32], index: 6, kind: input, shape index: {}]
  %s7 = inlined_call_operand.vmem [shape: f32[2,64,32], index: 7, kind: output, shape index: {}]
  %s8 = sld [smem:[#allocation0]]
  $region61: #{tpu_custom_call.1} parent=0
    _
  %s10 = ssub.s32 1, %s8
  %s11 = scalar_select 0, %s10, %s8
  loop: start=0, step=1, limit=4
  $region2: #{tpu_custom_call.1} parent=0 // loop_pre_header
    _
  $region3: #{tpu_custom_call.1} parent=0 // loop_header
    %s13 = sphi 0, %s17
    %p14 = scmp.ge.s32.totalorder %s13, 4
    %s23 = sphi 0, %s25
    %s26 = sphi 0, %s23
    %s27 = sphi 0, %s26
    %s43 = sphi 0, %s27
    %s47 = sphi 0, %s47
    %s49 = sphi 0, %s47
    %s50 = sphi 0, %s49
    %s64 = sphi 0, %s50
    %s68 = sphi 0, %s68
    %s70 = sphi 0, %s68
    %s71 = sphi 0, %s70
    %s85 = sphi 0, %s71
    %s89 = sphi 0, %s89
    %s91 = sphi 0, %s89
    %s92 = sphi 0, %s91
    %s106 = sphi 0, %s92
    %s110 = sphi 0, %s110
    %s112 = sphi 0, %s110
    %s113 = sphi 0, %s112
    %s127 = sphi 0, %s113
    %s131 = sphi 0, %s131
    %s133 = sphi 0, %s131
    %s134 = sphi 0, %s133
    %s148 = sphi 0, %s134
    %s152 = sphi 0, %s152
    %s154 = sphi 0, %s152
    %s155 = sphi 0, %s154
    %s169 = sphi 0, %s155
    %s175 = sphi 0, %s177
    %s178 = sphi 0, %s175
    %s179 = sphi 0, %s178
    %s195 = sphi 0, %s179
  $region4: #{tpu_custom_call.1} parent=0 // loop_header_branch
    %16 = sbr.rel (%p14) target = $region8
  $region5: #{tpu_custom_call.1} parent=0 // loop_body
    %s18 = ssub.s32 %s13, 1
    %s19 = ssub.s32 %s13, 2
    %s20 = sadd.s32 %s13, 1
    %s21 = ssub.s32 %s13, %s20
    %p22 = scmp.eq.s32.totalorder %s21, 0
    %s24 = sadd.s32 %s23, 1
    %s25 = scalar_select %p22, %s23, %s24
    %p28 = pneg %p22
    %p29 = scmp.eq.s32.totalorder %s13, 1
    %p30 = por %p28, %p29
    %p31 = scmp.ne.s32.totalorder %s23, %s26
    %p32 = scmp.eq.s32.totalorder %s13, 0
    %p33 = por %p31, %p32
    %p34 = scmp.ne.s32.totalorder %s23, %s26
    %p35 = scmp.eq.s32.totalorder %s18, 1
    %p36 = por %p34, %p35
    %p37 = scmp.ne.s32.totalorder %s26, %s27
    %p38 = scmp.eq.s32.totalorder %s18, 0
    %p39 = por %p37, %p38
    %p40 = scmp.ne.s32.totalorder %s26, %s27
    %p41 = scmp.eq.s32.totalorder %s19, 1
    %p42 = por %p40, %p41
    %p44 = scmp.ne.s32.totalorder %s27, %s43
    %p45 = scmp.eq.s32.totalorder %s19, 0
    %p46 = por %p44, %p45
    %s48 = sadd.s32 %s47, 1
    %p51 = scmp.eq.s32.totalorder %s13, 1
    %p52 = scmp.ne.s32.totalorder %s47, %s49
    %p53 = scmp.eq.s32.totalorder %s13, 0
    %p54 = por %p52, %p53
    %p55 = scmp.ne.s32.totalorder %s47, %s49
    %p56 = scmp.eq.s32.totalorder %s18, 1
    %p57 = por %p55, %p56
    %p58 = scmp.ne.s32.totalorder %s49, %s50
    %p59 = scmp.eq.s32.totalorder %s18, 0
    %p60 = por %p58, %p59
    %p61 = scmp.ne.s32.totalorder %s49, %s50
    %p62 = scmp.eq.s32.totalorder %s19, 1
    %p63 = por %p61, %p62
    %p65 = scmp.ne.s32.totalorder %s50, %s64
    %p66 = scmp.eq.s32.totalorder %s19, 0
    %p67 = por %p65, %p66
    %s69 = sadd.s32 %s68, 1
    %p72 = scmp.eq.s32.totalorder %s13, 1
    %p73 = scmp.ne.s32.totalorder %s68, %s70
    %p74 = scmp.eq.s32.totalorder %s13, 0
    %p75 = por %p73, %p74
    %p76 = scmp.ne.s32.totalorder %s68, %s70
    %p77 = scmp.eq.s32.totalorder %s18, 1
    %p78 = por %p76, %p77
    %p79 = scmp.ne.s32.totalorder %s70, %s71
    %p80 = scmp.eq.s32.totalorder %s18, 0
    %p81 = por %p79, %p80
    %p82 = scmp.ne.s32.totalorder %s70, %s71
    %p83 = scmp.eq.s32.totalorder %s19, 1
    %p84 = por %p82, %p83
    %p86 = scmp.ne.s32.totalorder %s71, %s85
    %p87 = scmp.eq.s32.totalorder %s19, 0
    %p88 = por %p86, %p87
    %s90 = sadd.s32 %s89, 1
    %p93 = scmp.eq.s32.totalorder %s13, 1
    %p94 = scmp.ne.s32.totalorder %s89, %s91
    %p95 = scmp.eq.s32.totalorder %s13, 0
    %p96 = por %p94, %p95
    %p97 = scmp.ne.s32.totalorder %s89, %s91
    %p98 = scmp.eq.s32.totalorder %s18, 1
    %p99 = por %p97, %p98
    %p100 = scmp.ne.s32.totalorder %s91, %s92
    %p101 = scmp.eq.s32.totalorder %s18, 0
    %p102 = por %p100, %p101
    %p103 = scmp.ne.s32.totalorder %s91, %s92
    %p104 = scmp.eq.s32.totalorder %s19, 1
    %p105 = por %p103, %p104
    %p107 = scmp.ne.s32.totalorder %s92, %s106
    %p108 = scmp.eq.s32.totalorder %s19, 0
    %p109 = por %p107, %p108
    %s111 = sadd.s32 %s110, 1
    %p114 = scmp.eq.s32.totalorder %s13, 1
    %p115 = scmp.ne.s32.totalorder %s110, %s112
    %p116 = scmp.eq.s32.totalorder %s13, 0
    %p117 = por %p115, %p116
    %p118 = scmp.ne.s32.totalorder %s110, %s112
    %p119 = scmp.eq.s32.totalorder %s18, 1
    %p120 = por %p118, %p119
    %p121 = scmp.ne.s32.totalorder %s112, %s113
    %p122 = scmp.eq.s32.totalorder %s18, 0
    %p123 = por %p121, %p122
    %p124 = scmp.ne.s32.totalorder %s112, %s113
    %p125 = scmp.eq.s32.totalorder %s19, 1
    %p126 = por %p124, %p125
    %p128 = scmp.ne.s32.totalorder %s113, %s127
    %p129 = scmp.eq.s32.totalorder %s19, 0
    %p130 = por %p128, %p129
    %s132 = sadd.s32 %s131, 1
    %p135 = scmp.eq.s32.totalorder %s13, 1
    %p136 = scmp.ne.s32.totalorder %s131, %s133
    %p137 = scmp.eq.s32.totalorder %s13, 0
    %p138 = por %p136, %p137
    %p139 = scmp.ne.s32.totalorder %s131, %s133
    %p140 = scmp.eq.s32.totalorder %s18, 1
    %p141 = por %p139, %p140
    %p142 = scmp.ne.s32.totalorder %s133, %s134
    %p143 = scmp.eq.s32.totalorder %s18, 0
    %p144 = por %p142, %p143
    %p145 = scmp.ne.s32.totalorder %s133, %s134
    %p146 = scmp.eq.s32.totalorder %s19, 1
    %p147 = por %p145, %p146
    %p149 = scmp.ne.s32.totalorder %s134, %s148
    %p150 = scmp.eq.s32.totalorder %s19, 0
    %p151 = por %p149, %p150
    %s153 = sadd.s32 %s152, 1
    %p156 = scmp.eq.s32.totalorder %s13, 1
    %p157 = scmp.ne.s32.totalorder %s152, %s154
    %p158 = scmp.eq.s32.totalorder %s13, 0
    %p159 = por %p157, %p158
    %p160 = scmp.ne.s32.totalorder %s152, %s154
    %p161 = scmp.eq.s32.totalorder %s18, 1
    %p162 = por %p160, %p161
    %p163 = scmp.ne.s32.totalorder %s154, %s155
    %p164 = scmp.eq.s32.totalorder %s18, 0
    %p165 = por %p163, %p164
    %p166 = scmp.ne.s32.totalorder %s154, %s155
    %p167 = scmp.eq.s32.totalorder %s19, 1
    %p168 = por %p166, %p167
    %p170 = scmp.ne.s32.totalorder %s155, %s169
    %p171 = scmp.eq.s32.totalorder %s19, 0
    %p172 = por %p170, %p171
    %s173 = ssub.s32 %s13, %s20
    %p174 = scmp.eq.s32.totalorder %s173, 0
    %s176 = sadd.s32 %s175, 1
    %s177 = scalar_select %p174, %s175, %s176
    %p180 = pneg %p174
    %p181 = scmp.eq.s32.totalorder %s13, 1
    %p182 = por %p180, %p181
    %p183 = scmp.ne.s32.totalorder %s175, %s178
    %p184 = scmp.eq.s32.totalorder %s13, 0
    %p185 = por %p183, %p184
    %p186 = scmp.ne.s32.totalorder %s175, %s178
    %p187 = scmp.eq.s32.totalorder %s18, 1
    %p188 = por %p186, %p187
    %p189 = scmp.ne.s32.totalorder %s178, %s179
    %p190 = scmp.eq.s32.totalorder %s18, 0
    %p191 = por %p189, %p190
    %p192 = scmp.ne.s32.totalorder %s178, %s179
    %p193 = scmp.eq.s32.totalorder %s19, 1
    %p194 = por %p192, %p193
    %p196 = scmp.ne.s32.totalorder %s179, %s195
    %p197 = scmp.eq.s32.totalorder %s19, 0
    %p198 = por %p196, %p197
    %p199 = scmp.le.s32.totalorder 1, %s13
    %p200 = scmp.lt.s32.totalorder %s13, 3
    %p201 = pnand %p199, %p200
    %p202 = pneg %p201
    // Predicated region
    $region9: #{tpu_custom_call.1} parent=5 // pred_check
      _
    $region10: #{tpu_custom_call.1} parent=5 // pred_check_branch
      %204 = sbr.rel (%p201) target = $region12
    $region11: #{tpu_custom_call.1} parent=5 // pred_region
      %s205 = ssub.s32 %s13, 1
      // Predicated region
      $region13: #{tpu_custom_call.1} parent=11 // pred_check
        %p206 = pneg %p60
      $region14: #{tpu_custom_call.1} parent=11 // pred_check_branch
        %208 = sbr.rel (%p206) target = $region16
      $region15: #{tpu_custom_call.1} parent=11 // pred_region
        _
      $region16: #{tpu_custom_call.1} parent=11 // pred_fallthru
        _
      // Predicated region
      $region17: #{tpu_custom_call.1} parent=11 // pred_check
        %p209 = pneg %p81
      $region18: #{tpu_custom_call.1} parent=11 // pred_check_branch
        %211 = sbr.rel (%p209) target = $region20
      $region19: #{tpu_custom_call.1} parent=11 // pred_region
        _
      $region20: #{tpu_custom_call.1} parent=11 // pred_fallthru
        _
      // Predicated region
      $region21: #{tpu_custom_call.1} parent=11 // pred_check
        %p212 = pneg %p102
      $region22: #{tpu_custom_call.1} parent=11 // pred_check_branch
        %214 = sbr.rel (%p212) target = $region24
      $region23: #{tpu_custom_call.1} parent=11 // pred_region
        _
      $region24: #{tpu_custom_call.1} parent=11 // pred_fallthru
        _
      // Predicated region
      $region25: #{tpu_custom_call.1} parent=11 // pred_check
        %p215 = pneg %p123
      $region26: #{tpu_custom_call.1} parent=11 // pred_check_branch
        %217 = sbr.rel (%p215) target = $region28
      $region27: #{tpu_custom_call.1} parent=11 // pred_region
        _
      $region28: #{tpu_custom_call.1} parent=11 // pred_fallthru
        _
      // Predicated region
      $region29: #{tpu_custom_call.1} parent=11 // pred_check
        %p218 = pneg %p144
      $region30: #{tpu_custom_call.1} parent=11 // pred_check_branch
        %220 = sbr.rel (%p218) target = $region32
      $region31: #{tpu_custom_call.1} parent=11 // pred_region
        _
      $region32: #{tpu_custom_call.1} parent=11 // pred_fallthru
        _
      // Predicated region
      $region33: #{tpu_custom_call.1} parent=11 // pred_check
        %p221 = pneg %p165
      $region34: #{tpu_custom_call.1} parent=11 // pred_check_branch
        %223 = sbr.rel (%p221) target = $region36
      $region35: #{tpu_custom_call.1} parent=11 // pred_region
        _
      $region36: #{tpu_custom_call.1} parent=11 // pred_fallthru
        _
    $region12: #{tpu_custom_call.1} parent=5 // pred_fallthru
      _
    %p224 = scmp.lt.s32.totalorder %s13, 2
    // Predicated region
    $region37: #{tpu_custom_call.1} parent=5 // pred_check
      %p225 = pneg %p224
    $region38: #{tpu_custom_call.1} parent=5 // pred_check_branch
      %227 = sbr.rel (%p225) target = $region40
    $region39: #{tpu_custom_call.1} parent=5 // pred_region
      // Predicated region
      $region41: #{tpu_custom_call.1} parent=39 // pred_check
        %p228 = pneg %p33
      $region42: #{tpu_custom_call.1} parent=39 // pred_check_branch
        %230 = sbr.rel (%p228) target = $region44
      $region43: #{tpu_custom_call.1} parent=39 // pred_region
        %p231 = scmp.lt.s32.totalorder %s13, 1
        %s232 = scalar_select %p231, %s13, 1
        %s233 = smul.addr %s232, 8
        %s234 = smul.addr %s233, 8
        %s235 = scalar_lea.vmem %s0, %s234
      $region44: #{tpu_custom_call.1} parent=39 // pred_fallthru
        _
    $region40: #{tpu_custom_call.1} parent=5 // pred_fallthru
      _
    %p236 = scmp.le.s32.totalorder 1, %s13
    %p237 = scmp.lt.s32.totalorder %s13, 3
    %p238 = pnand %p236, %p237
    %p239 = pneg %p238
    // Predicated region
    $region45: #{tpu_custom_call.1} parent=5 // pred_check
      _
    $region46: #{tpu_custom_call.1} parent=5 // pred_check_branch
      %241 = sbr.rel (%p238) target = $region48
    $region47: #{tpu_custom_call.1} parent=5 // pred_region
      %s242 = ssub.s32 %s13, 1
      %p243 = scmp.lt.s32.totalorder %s18, 1
      %s244 = scalar_select %p243, %s18, 1
      %s245 = smul.addr %s244, 8
      %s246 = smul.addr %s245, 8
      %s247 = scalar_lea.vmem %s0, %s246
      %p248 = pneg %p39
      %p249 = pneg %p36
      %p250 = pneg %p60
      %p251 = pneg %p57
      %p252 = pneg %p81
      %p253 = pneg %p78
      %p254 = pneg %p102
      %p255 = pneg %p99
      %p256 = pneg %p123
      %p257 = pneg %p120
      %p258 = pneg %p144
      %p259 = pneg %p141
      %p260 = pneg %p165
      %p261 = pneg %p162
      %p262 = pneg %p191
      %p263 = pneg %p188
      %p264 = scmp.lt.s32.totalorder %s18, 1
      %s265 = scalar_select %p264, %s18, 1
      %s266 = smul.addr %s265, 8
      %s267 = smul.addr %s266, 8
      %s268 = scalar_lea.vmem %s7, %s267
      %p269 = scmp.lt.s32.totalorder %s18, 1
      %s270 = scalar_select %p269, %s18, 1
      %s271 = smul.addr %s270, 8
      %s272 = smul.addr %s271, 8
      %s273 = scalar_lea.vmem %s0, %s272
      %p274 = scmp.lt.s32.totalorder %s18, 1
      %s275 = scalar_select %p274, %s18, 1
      %s276 = smul.addr %s275, 8
      %s277 = smul.addr %s276, 8
      %s278 = scalar_lea.vmem %s7, %s277
      %v280 = vld [vmem:[%s273] sm:$0xff]
      %v281 = vld [vmem:[%s273 + $0x8] sm:$0xff]
      %v282 = vld [vmem:[%s273 + $0x10] sm:$0xff]
      %v283 = vld [vmem:[%s273 + $0x18] sm:$0xff]
      %v284 = vld [vmem:[%s273 + $0x20] sm:$0xff]
      %v285 = vld [vmem:[%s273 + $0x28] sm:$0xff]
      %v286 = vld [vmem:[%s273 + $0x30] sm:$0xff]
      %v287 = vld [vmem:[%s273 + $0x38] sm:$0xff]
      %vm288 = vcmask 261120
      %v289 = vsel %vm288, %v280, 0.0
      %v290 = vsel %vm288, %v281, 0.0
      %v291 = vadd.f32 %v289, %v290
      %v292 = vsel %vm288, %v282, 0.0
      %v293 = vadd.f32 %v291, %v292
      %v294 = vsel %vm288, %v283, 0.0
      %v295 = vadd.f32 %v293, %v294
      %v296 = vsel %vm288, %v284, 0.0
      %v297 = vadd.f32 %v295, %v296
      %v298 = vsel %vm288, %v285, 0.0
      %v299 = vadd.f32 %v297, %v298
      %v300 = vsel %vm288, %v286, 0.0
      %v301 = vadd.f32 %v299, %v300
      %v302 = vsel %vm288, %v287, 0.0
      %v303 = vadd.f32 %v301, %v302
      %v304 = vrot.slane %v303, 4
      %v305 = vadd.f32 %v303, %v304
      %v306 = vrot.slane %v305, 2
      %v307 = vadd.f32 %v305, %v306
      %v308 = vrot.slane %v307, 1
      %v309 = vadd.f32 %v307, %v308
      %v310 = vmul.f32 %v280, %v280
      %v311 = vmul.f32 %v281, %v281
      %v312 = vmul.f32 %v282, %v282
      %v313 = vmul.f32 %v283, %v283
      %v314 = vmul.f32 %v284, %v284
      %v315 = vmul.f32 %v285, %v285
      %v316 = vmul.f32 %v286, %v286
      %v317 = vmul.f32 %v287, %v287
      %v318 = vsel %vm288, %v310, 0.0
      %v319 = vsel %vm288, %v311, 0.0
      %v320 = vadd.f32 %v318, %v319
      %v321 = vsel %vm288, %v312, 0.0
      %v322 = vadd.f32 %v320, %v321
      %v323 = vsel %vm288, %v313, 0.0
      %v324 = vadd.f32 %v322, %v323
      %v325 = vsel %vm288, %v314, 0.0
      %v326 = vadd.f32 %v324, %v325
      %v327 = vsel %vm288, %v315, 0.0
      %v328 = vadd.f32 %v326, %v327
      %v329 = vsel %vm288, %v316, 0.0
      %v330 = vadd.f32 %v328, %v329
      %v331 = vsel %vm288, %v317, 0.0
      %v332 = vadd.f32 %v330, %v331
      %v333 = vrot.slane %v332, 4
      %v334 = vadd.f32 %v332, %v333
      %v335 = vrot.slane %v334, 2
      %v336 = vadd.f32 %v334, %v335
      %v337 = vrot.slane %v336, 1
      %v338 = vadd.f32 %v336, %v337
      %vm339 = vcmask 1040384
      %v340 = vsel %vm339, %v309, %v338
      %v341 = vld [vmem:[%s6] sm:$0xff]
      %v342 = vld [vmem:[%s6 + $0x8] sm:$0xff]
      %v343 = vld [vmem:[%s6 + $0x10] sm:$0xff]
      %v344 = vld [vmem:[%s6 + $0x18] sm:$0xff]
      %v346 = vsel %vm288, %v340, 0
      %348 = vmatpush.msra.mxu0 0.0
      %349 = vmatpush.msra.mxu0 0.0
      %350 = vmatpush.msra.mxu0 0.0
      %351 = vmatpush.msra.mxu0 0.0
      %352 = vmatpush.msra.mxu0 0.0
      %353 = vmatpush.msra.mxu0 0.0
      %354 = vmatpush.msra.mxu0 0.0
      %355 = vmatpush.msra.mxu0 0.0
      %356 = vmatpush.msra.mxu0 0.0
      %357 = vmatpush.msra.mxu0 0.0
      %358 = vmatpush.msra.mxu0 0.0
      %359 = vmatpush.msra.mxu0 0.0
      %v360 = vand.u32 %v344, 4294901760
      %361 = vmatpush.msra.mxu0 %v360
      %v362 = vand.u32 %v343, 4294901760
      %363 = vmatpush.msra.mxu0 %v362
      %v364 = vand.u32 %v342, 4294901760
      %365 = vmatpush.msra.mxu0 %v364
      %v366 = vand.u32 %v341, 4294901760
      %367 = vmatpush.msra.mxu0 %v366
      %v368 = vand.u32 %v346, 4294901760
      %v369 = vsub.f32 %v346, %v368
      %v370 = vand.u32 %v369, 4294901760
      %v371 = vsub.f32 %v369, %v370
      %v372 = vand.u32 %v371, 4294901760
      %373 = vmatmul.f32.gmra.mxu0 %v372
      %v374 = vpop.f32.mrf.mxu0
      %v375 = vadd.f32 0.0, %v374
      %376 = vdwg.mxu0
      %377 = vmatpush.msra.mxu0 0.0
      %378 = vmatpush.msra.mxu0 0.0
      %379 = vmatpush.msra.mxu0 0.0
      %380 = vmatpush.msra.mxu0 0.0
      %381 = vmatpush.msra.mxu0 0.0
      %382 = vmatpush.msra.mxu0 0.0
      %383 = vmatpush.msra.mxu0 0.0
      %384 = vmatpush.msra.mxu0 0.0
      %385 = vmatpush.msra.mxu0 0.0
      %386 = vmatpush.msra.mxu0 0.0
      %387 = vmatpush.msra.mxu0 0.0
      %388 = vmatpush.msra.mxu0 0.0
      %v389 = vand.u32 %v344, 4294901760
      %v390 = vsub.f32 %v344, %v389
      %v391 = vand.u32 %v390, 4294901760
      %v392 = vsub.f32 %v390, %v391
      %v393 = vand.u32 %v392, 4294901760
      %394 = vmatpush.msra.mxu0 %v393
      %v395 = vand.u32 %v343, 4294901760
      %v396 = vsub.f32 %v343, %v395
      %v397 = vand.u32 %v396, 4294901760
      %v398 = vsub.f32 %v396, %v397
      %v399 = vand.u32 %v398, 4294901760
      %400 = vmatpush.msra.mxu0 %v399
      %v401 = vand.u32 %v342, 4294901760
      %v402 = vsub.f32 %v342, %v401
      %v403 = vand.u32 %v402, 4294901760
      %v404 = vsub.f32 %v402, %v403
      %v405 = vand.u32 %v404, 4294901760
      %406 = vmatpush.msra.mxu0 %v405
      %v407 = vand.u32 %v341, 4294901760
      %v408 = vsub.f32 %v341, %v407
      %v409 = vand.u32 %v408, 4294901760
      %v410 = vsub.f32 %v408, %v409
      %v411 = vand.u32 %v410, 4294901760
      %412 = vmatpush.msra.mxu0 %v411
      %v413 = vand.u32 %v346, 4294901760
      %414 = vmatmul.f32.gmra.mxu0 %v413
      %v415 = vpop.f32.mrf.mxu0
      %v416 = vadd.f32 %v375, %v415
      %417 = vdwg.mxu0
      %418 = vmatpush.msra.mxu0 0.0
      %419 = vmatpush.msra.mxu0 0.0
      %420 = vmatpush.msra.mxu0 0.0
      %421 = vmatpush.msra.mxu0 0.0
      %422 = vmatpush.msra.mxu0 0.0
      %423 = vmatpush.msra.mxu0 0.0
      %424 = vmatpush.msra.mxu0 0.0
      %425 = vmatpush.msra.mxu0 0.0
      %426 = vmatpush.msra.mxu0 0.0
      %427 = vmatpush.msra.mxu0 0.0
      %428 = vmatpush.msra.mxu0 0.0
      %429 = vmatpush.msra.mxu0 0.0
      %v430 = vand.u32 %v344, 4294901760
      %v431 = vsub.f32 %v344, %v430
      %432 = vmatpush.msra.mxu0 %v431
      %v433 = vand.u32 %v343, 4294901760
      %v434 = vsub.f32 %v343, %v433
      %435 = vmatpush.msra.mxu0 %v434
      %v436 = vand.u32 %v342, 4294901760
      %v437 = vsub.f32 %v342, %v436
      %438 = vmatpush.msra.mxu0 %v437
      %v439 = vand.u32 %v341, 4294901760
      %v440 = vsub.f32 %v341, %v439
      %441 = vmatpush.msra.mxu0 %v440
      %v442 = vand.u32 %v346, 4294901760
      %v443 = vsub.f32 %v346, %v442
      %444 = vmatmul.f32.gmra.mxu0 %v443
      %v445 = vpop.f32.mrf.mxu0
      %v446 = vadd.f32 %v416, %v445
      %447 = vdwg.mxu0
      %448 = vmatpush.msra.mxu0 0.0
      %449 = vmatpush.msra.mxu0 0.0
      %450 = vmatpush.msra.mxu0 0.0
      %451 = vmatpush.msra.mxu0 0.0
      %452 = vmatpush.msra.mxu0 0.0
      %453 = vmatpush.msra.mxu0 0.0
      %454 = vmatpush.msra.mxu0 0.0
      %455 = vmatpush.msra.mxu0 0.0
      %456 = vmatpush.msra.mxu0 0.0
      %457 = vmatpush.msra.mxu0 0.0
      %458 = vmatpush.msra.mxu0 0.0
      %459 = vmatpush.msra.mxu0 0.0
      %v460 = vand.u32 %v344, 4294901760
      %461 = vmatpush.msra.mxu0 %v460
      %v462 = vand.u32 %v343, 4294901760
      %463 = vmatpush.msra.mxu0 %v462
      %v464 = vand.u32 %v342, 4294901760
      %465 = vmatpush.msra.mxu0 %v464
      %v466 = vand.u32 %v341, 4294901760
      %467 = vmatpush.msra.mxu0 %v466
      %v468 = vand.u32 %v346, 4294901760
      %v469 = vsub.f32 %v346, %v468
      %v470 = vand.u32 %v469, 4294901760
      %471 = vmatmul.f32.gmra.mxu0 %v470
      %v472 = vpop.f32.mrf.mxu0
      %v473 = vadd.f32 %v446, %v472
      %474 = vdwg.mxu0
      %475 = vmatpush.msra.mxu0 0.0
      %476 = vmatpush.msra.mxu0 0.0
      %477 = vmatpush.msra.mxu0 0.0
      %478 = vmatpush.msra.mxu0 0.0
      %479 = vmatpush.msra.mxu0 0.0
      %480 = vmatpush.msra.mxu0 0.0
      %481 = vmatpush.msra.mxu0 0.0
      %482 = vmatpush.msra.mxu0 0.0
      %483 = vmatpush.msra.mxu0 0.0
      %484 = vmatpush.msra.mxu0 0.0
      %485 = vmatpush.msra.mxu0 0.0
      %486 = vmatpush.msra.mxu0 0.0
      %v487 = vand.u32 %v344, 4294901760
      %v488 = vsub.f32 %v344, %v487
      %v489 = vand.u32 %v488, 4294901760
      %490 = vmatpush.msra.mxu0 %v489
      %v491 = vand.u32 %v343, 4294901760
      %v492 = vsub.f32 %v343, %v491
      %v493 = vand.u32 %v492, 4294901760
      %494 = vmatpush.msra.mxu0 %v493
      %v495 = vand.u32 %v342, 4294901760
      %v496 = vsub.f32 %v342, %v495
      %v497 = vand.u32 %v496, 4294901760
      %498 = vmatpush.msra.mxu0 %v497
      %v499 = vand.u32 %v341, 4294901760
      %v500 = vsub.f32 %v341, %v499
      %v501 = vand.u32 %v500, 4294901760
      %502 = vmatpush.msra.mxu0 %v501
      %v503 = vand.u32 %v346, 4294901760
      %504 = vmatmul.f32.gmra.mxu0 %v503
      %v505 = vpop.f32.mrf.mxu0
      %v506 = vadd.f32 %v473, %v505
      %507 = vdwg.mxu0
      %508 = vmatpush.msra.mxu0 0.0
      %509 = vmatpush.msra.mxu0 0.0
      %510 = vmatpush.msra.mxu0 0.0
      %511 = vmatpush.msra.mxu0 0.0
      %512 = vmatpush.msra.mxu0 0.0
      %513 = vmatpush.msra.mxu0 0.0
      %514 = vmatpush.msra.mxu0 0.0
      %515 = vmatpush.msra.mxu0 0.0
      %516 = vmatpush.msra.mxu0 0.0
      %517 = vmatpush.msra.mxu0 0.0
      %518 = vmatpush.msra.mxu0 0.0
      %519 = vmatpush.msra.mxu0 0.0
      %v520 = vand.u32 %v344, 4294901760
      %521 = vmatpush.msra.mxu0 %v520
      %v522 = vand.u32 %v343, 4294901760
      %523 = vmatpush.msra.mxu0 %v522
      %v524 = vand.u32 %v342, 4294901760
      %525 = vmatpush.msra.mxu0 %v524
      %v526 = vand.u32 %v341, 4294901760
      %527 = vmatpush.msra.mxu0 %v526
      %v528 = vand.u32 %v346, 4294901760
      %529 = vmatmul.f32.gmra.mxu0 %v528
      %v530 = vpop.f32.mrf.mxu0
      %v531 = vadd.f32 %v506, %v530
      %532 = vdwg.mxu0
      %v533 = vrcp.pop 256.0
      %v534 = vmul.f32 256.0, %v533
      %v535 = vsub.f32 1.0, %v534
      %v536 = vmul.f32 %v533, %v535
      %v537 = vadd.f32 %v533, %v536
      %vm538 = vweird.f32 %v533
      %v539 = vsel %vm538, %v533, %v537
      %v540 = vmul.f32 %v531, %v539
      %v541 = vmul.f32 %v540, %v540
      %v543 = vrot.slane %v541, 7
      %v545 = vsub.f32 %v540, %v543
      %v546 = vadd.f32 %v545, 1e-05
      %v547 = vrsqrt.pop %v546
      %v548 = vmul.f32 %v547, %v546
      %v549 = vmul.f32 %v548, %v547
      %v550 = vmul.f32 0.5, %v549
      %v551 = vsub.f32 1.5, %v550
      %v552 = vmul.f32 %v547, %v551
      %vm553 = vweird.f32 %v546
      %vm554 = vweird.f32 %v547
      %vm555 = vmor %vm553, %vm554
      %v556 = vsel %vm555, %v547, %v552
      %v557 = vperm.slane %v540, 0
      %v558 = vsub.f32 %v280, %v557
      %v559 = vsub.f32 %v281, %v557
      %v560 = vsub.f32 %v282, %v557
      %v561 = vsub.f32 %v283, %v557
      %v562 = vsub.f32 %v284, %v557
      %v563 = vsub.f32 %v285, %v557
      %v564 = vsub.f32 %v286, %v557
      %v565 = vsub.f32 %v287, %v557
      %v566 = vperm.slane %v556, 1
      %v567 = vmul.f32 %v558, %v566
      %v568 = vmul.f32 %v559, %v566
      %v569 = vmul.f32 %v560, %v566
      %v570 = vmul.f32 %v561, %v566
      %v571 = vmul.f32 %v562, %v566
      %v572 = vmul.f32 %v563, %v566
      %v573 = vmul.f32 %v564, %v566
      %v574 = vmul.f32 %v565, %v566
      %v575 = vld [vmem:[%s4] sm:$0x1]
      %v577 = vperm.slane %v575, 0
      %v579 = vmul.f32 %v567, %v577
      %v580 = vmul.f32 %v568, %v577
      %v581 = vmul.f32 %v569, %v577
      %v582 = vmul.f32 %v570, %v577
      %v583 = vmul.f32 %v571, %v577
      %v584 = vmul.f32 %v572, %v577
      %v585 = vmul.f32 %v573, %v577
      %v586 = vmul.f32 %v574, %v577
      %v587 = vld [vmem:[%s5] sm:$0x1]
      %v589 = vperm.slane %v587, 0
      %v591 = vadd.f32 %v579, %v589
      %v592 = vadd.f32 %v580, %v589
      %v593 = vadd.f32 %v581, %v589
      %v594 = vadd.f32 %v582, %v589
      %v595 = vadd.f32 %v583, %v589
      %v596 = vadd.f32 %v584, %v589
      %v597 = vadd.f32 %v585, %v589
      %v598 = vadd.f32 %v586, %v589
      %v599 = vpack.c.bf16 %v592, %v591
      %v600 = vpack.c.bf16 %v594, %v593
      %v601 = vpack.c.bf16 %v596, %v595
      %v602 = vpack.c.bf16 %v598, %v597
      %v603 = vld [vmem:[%s1] sm:$0xf]
      %v604 = vld [vmem:[%s1 + $0x4] sm:$0xf]
      %v605 = vld [vmem:[%s1 + $0x8] sm:$0xf]
      %v606 = vld [vmem:[%s1 + $0xc] sm:$0xf]
      %v611 = vunpack.c.l.b16 %v603
      %v612 = vunpack.c.l.b16 %v604
      %v613 = vunpack.c.l.b16 %v605
      %v614 = vunpack.c.l.b16 %v606
      %v615 = vpack.c.b16 %v612, %v611
      %v616 = vpack.c.b16 %v614, %v613
      %v620 = vsel %vm288, %v599, 0
      %v623 = vsel %vm288, %v600, 0
      %v626 = vsel %vm288, %v601, 0
      %v629 = vsel %vm288, %v602, 0
      %631 = vmatpush.bf16.msra.mxu0 0
      %632 = vmatpush.bf16.msra.mxu0 0
      %633 = vmatpush.bf16.msra.mxu0 0
      %634 = vmatpush.bf16.msra.mxu0 0
      %635 = vmatpush.bf16.msra.mxu0 0
      %636 = vmatpush.bf16.msra.mxu0 0
      %637 = vmatpush.bf16.msra.mxu0 %v616
      %638 = vmatpush.bf16.msra.mxu0 %v615
      %639 = vmatmul.bf16.gmra.mxu0 %v620
      %v640 = vpop.f32.mrf.mxu0
      %v641 = vadd.f32 0.0, %v640
      %v642 = vpop.f32.mrf.mxu0
      %v643 = vadd.f32 0.0, %v642
      %644 = vmatmul.bf16.gmra.mxu0 %v623
      %v645 = vpop.f32.mrf.mxu0
      %v646 = vadd.f32 0.0, %v645
      %v647 = vpop.f32.mrf.mxu0
      %v648 = vadd.f32 0.0, %v647
      %649 = vmatmul.bf16.gmra.mxu0 %v626
      %v650 = vpop.f32.mrf.mxu0
      %v651 = vadd.f32 0.0, %v650
      %v652 = vpop.f32.mrf.mxu0
      %v653 = vadd.f32 0.0, %v652
      %654 = vmatmul.bf16.gmra.mxu0 %v629
      %v655 = vpop.f32.mrf.mxu0
      %v656 = vadd.f32 0.0, %v655
      %v657 = vpop.f32.mrf.mxu0
      %v658 = vadd.f32 0.0, %v657
      %659 = vdwg.mxu0
      %v660 = vpack.c.bf16 %v641, %v641
      %v661 = vpack.c.bf16 %v643, %v643
      %v662 = vpack.c.bf16 %v646, %v646
      %v663 = vpack.c.bf16 %v648, %v648
      %v664 = vpack.c.bf16 %v651, %v651
      %v665 = vpack.c.bf16 %v653, %v653
      %v666 = vpack.c.bf16 %v656, %v656
      %v667 = vpack.c.bf16 %v658, %v658
      %676 = vrot.lane.b32.xlu0 %v660, 112
      %v677 = vpop.permute.xlu0 %676
      %678 = vrot.lane.b32.xlu0 %v661, 112
      %v679 = vpop.permute.xlu0 %678
      %680 = vrot.lane.b32.xlu0 %v662, 112
      %v681 = vpop.permute.xlu0 %680
      %682 = vrot.lane.b32.xlu0 %v663, 112
      %v683 = vpop.permute.xlu0 %682
      %684 = vrot.lane.b32.xlu0 %v664, 112
      %v685 = vpop.permute.xlu0 %684
      %686 = vrot.lane.b32.xlu0 %v665, 112
      %v687 = vpop.permute.xlu0 %686
      %688 = vrot.lane.b32.xlu0 %v666, 112
      %v689 = vpop.permute.xlu0 %688
      %690 = vrot.lane.b32.xlu0 %v667, 112
      %v691 = vpop.permute.xlu0 %690
      %692 = vrot.lane.b32.xlu0 %v660, 96
      %v693 = vpop.permute.xlu0 %692
      %694 = vrot.lane.b32.xlu0 %v661, 96
      %v695 = vpop.permute.xlu0 %694
      %696 = vrot.lane.b32.xlu0 %v662, 96
      %v697 = vpop.permute.xlu0 %696
      %698 = vrot.lane.b32.xlu0 %v663, 96
      %v699 = vpop.permute.xlu0 %698
      %700 = vrot.lane.b32.xlu0 %v664, 96
      %v701 = vpop.permute.xlu0 %700
      %702 = vrot.lane.b32.xlu0 %v665, 96
      %v703 = vpop.permute.xlu0 %702
      %704 = vrot.lane.b32.xlu0 %v666, 96
      %v705 = vpop.permute.xlu0 %704
      %706 = vrot.lane.b32.xlu0 %v667, 96
      %v707 = vpop.permute.xlu0 %706
      %708 = vrot.lane.b32.xlu0 %v660, 80
      %v709 = vpop.permute.xlu0 %708
      %710 = vrot.lane.b32.xlu0 %v661, 80
      %v711 = vpop.permute.xlu0 %710
      %712 = vrot.lane.b32.xlu0 %v662, 80
      %v713 = vpop.permute.xlu0 %712
      %714 = vrot.lane.b32.xlu0 %v663, 80
      %v715 = vpop.permute.xlu0 %714
      %716 = vrot.lane.b32.xlu0 %v664, 80
      %v717 = vpop.permute.xlu0 %716
      %718 = vrot.lane.b32.xlu0 %v665, 80
      %v719 = vpop.permute.xlu0 %718
      %720 = vrot.lane.b32.xlu0 %v666, 80
      %v721 = vpop.permute.xlu0 %720
      %722 = vrot.lane.b32.xlu0 %v667, 80
      %v723 = vpop.permute.xlu0 %722
      %724 = vrot.lane.b32.xlu0 %v660, 64
      %v725 = vpop.permute.xlu0 %724
      %726 = vrot.lane.b32.xlu0 %v661, 64
      %v727 = vpop.permute.xlu0 %726
      %728 = vrot.lane.b32.xlu0 %v662, 64
      %v729 = vpop.permute.xlu0 %728
      %730 = vrot.lane.b32.xlu0 %v663, 64
      %v731 = vpop.permute.xlu0 %730
      %732 = vrot.lane.b32.xlu0 %v664, 64
      %v733 = vpop.permute.xlu0 %732
      %734 = vrot.lane.b32.xlu0 %v665, 64
      %v735 = vpop.permute.xlu0 %734
      %736 = vrot.lane.b32.xlu0 %v666, 64
      %v737 = vpop.permute.xlu0 %736
      %738 = vrot.lane.b32.xlu0 %v667, 64
      %v739 = vpop.permute.xlu0 %738
      %740 = vrot.lane.b32.xlu0 %v660, 48
      %v741 = vpop.permute.xlu0 %740
      %742 = vrot.lane.b32.xlu0 %v661, 48
      %v743 = vpop.permute.xlu0 %742
      %744 = vrot.lane.b32.xlu0 %v662, 48
      %v745 = vpop.permute.xlu0 %744
      %746 = vrot.lane.b32.xlu0 %v663, 48
      %v747 = vpop.permute.xlu0 %746
      %748 = vrot.lane.b32.xlu0 %v664, 48
      %v749 = vpop.permute.xlu0 %748
      %750 = vrot.lane.b32.xlu0 %v665, 48
      %v751 = vpop.permute.xlu0 %750
      %752 = vrot.lane.b32.xlu0 %v666, 48
      %v753 = vpop.permute.xlu0 %752
      %754 = vrot.lane.b32.xlu0 %v667, 48
      %v755 = vpop.permute.xlu0 %754
      %v758 = vpack.i.b16 %v677, %v660
      %v760 = vshrl.u32 %v660, 16
      %v761 = vshrl.u32 %v677, 16
      %v762 = vpack.i.b16 %v761, %v760
      %v766 = vpack.i.b16 %v709, %v693
      %v767 = vshrl.u32 %v693, 16
      %v768 = vshrl.u32 %v709, 16
      %v769 = vpack.i.b16 %v768, %v767
      %v772 = vpack.i.b16 %v741, %v725
      %v774 = vshrl.u32 %v725, 16
      %v775 = vshrl.u32 %v741, 16
      %v776 = vpack.i.b16 %v775, %v774
      %v780 = vpack.i.b16 %v679, %v661
      %v782 = vshrl.u32 %v661, 16
      %v783 = vshrl.u32 %v679, 16
      %v784 = vpack.i.b16 %v783, %v782
      %v788 = vpack.i.b16 %v711, %v695
      %v789 = vshrl.u32 %v695, 16
      %v790 = vshrl.u32 %v711, 16
      %v791 = vpack.i.b16 %v790, %v789
      %v794 = vpack.i.b16 %v743, %v727
      %v796 = vshrl.u32 %v727, 16
      %v797 = vshrl.u32 %v743, 16
      %v798 = vpack.i.b16 %v797, %v796
      %v802 = vpack.i.b16 %v681, %v662
      %v804 = vshrl.u32 %v662, 16
      %v805 = vshrl.u32 %v681, 16
      %v806 = vpack.i.b16 %v805, %v804
      %v810 = vpack.i.b16 %v713, %v697
      %v811 = vshrl.u32 %v697, 16
      %v812 = vshrl.u32 %v713, 16
      %v813 = vpack.i.b16 %v812, %v811
      %v816 = vpack.i.b16 %v745, %v729
      %v818 = vshrl.u32 %v729, 16
      %v819 = vshrl.u32 %v745, 16
      %v820 = vpack.i.b16 %v819, %v818
      %v824 = vpack.i.b16 %v683, %v663
      %v826 = vshrl.u32 %v663, 16
      %v827 = vshrl.u32 %v683, 16
      %v828 = vpack.i.b16 %v827, %v826
      %v832 = vpack.i.b16 %v715, %v699
      %v833 = vshrl.u32 %v699, 16
      %v834 = vshrl.u32 %v715, 16
      %v835 = vpack.i.b16 %v834, %v833
      %v838 = vpack.i.b16 %v747, %v731
      %v840 = vshrl.u32 %v731, 16
      %v841 = vshrl.u32 %v747, 16
      %v842 = vpack.i.b16 %v841, %v840
      %v846 = vpack.i.b16 %v685, %v664
      %v848 = vshrl.u32 %v664, 16
      %v849 = vshrl.u32 %v685, 16
      %v850 = vpack.i.b16 %v849, %v848
      %v854 = vpack.i.b16 %v717, %v701
      %v855 = vshrl.u32 %v701, 16
      %v856 = vshrl.u32 %v717, 16
      %v857 = vpack.i.b16 %v856, %v855
      %v860 = vpack.i.b16 %v749, %v733
      %v862 = vshrl.u32 %v733, 16
      %v863 = vshrl.u32 %v749, 16
      %v864 = vpack.i.b16 %v863, %v862
      %v868 = vpack.i.b16 %v687, %v665
      %v870 = vshrl.u32 %v665, 16
      %v871 = vshrl.u32 %v687, 16
      %v872 = vpack.i.b16 %v871, %v870
      %v876 = vpack.i.b16 %v719, %v703
      %v877 = vshrl.u32 %v703, 16
      %v878 = vshrl.u32 %v719, 16
      %v879 = vpack.i.b16 %v878, %v877
      %v882 = vpack.i.b16 %v751, %v735
      %v884 = vshrl.u32 %v735, 16
      %v885 = vshrl.u32 %v751, 16
      %v886 = vpack.i.b16 %v885, %v884
      %v890 = vpack.i.b16 %v689, %v666
      %v892 = vshrl.u32 %v666, 16
      %v893 = vshrl.u32 %v689, 16
      %v894 = vpack.i.b16 %v893, %v892
      %v898 = vpack.i.b16 %v721, %v705
      %v899 = vshrl.u32 %v705, 16
      %v900 = vshrl.u32 %v721, 16
      %v901 = vpack.i.b16 %v900, %v899
      %v904 = vpack.i.b16 %v753, %v737
      %v906 = vshrl.u32 %v737, 16
      %v907 = vshrl.u32 %v753, 16
      %v908 = vpack.i.b16 %v907, %v906
      %v912 = vpack.i.b16 %v691, %v667
      %v914 = vshrl.u32 %v667, 16
      %v915 = vshrl.u32 %v691, 16
      %v916 = vpack.i.b16 %v915, %v914
      %v920 = vpack.i.b16 %v723, %v707
      %v921 = vshrl.u32 %v707, 16
      %v922 = vshrl.u32 %v723, 16
      %v923 = vpack.i.b16 %v922, %v921
      %v926 = vpack.i.b16 %v755, %v739
      %v928 = vshrl.u32 %v739, 16
      %v929 = vshrl.u32 %v755, 16
      %v930 = vpack.i.b16 %v929, %v928
      %v932 = vrot.slane %v772, 4
      %vm933 = vcmask 1047556
      %v934 = vsel %vm933, %v932, %v758
      %v936 = vunpack.c.l.s4 1983009808
      %v937 = vunpack.c.0.s8 %v936
      %v938 = vperm.slane %v934, %v937
      %v941 = vunpack.c.l.s4 1983009808
      %v942 = vunpack.c.0.s8 %v941
      %v943 = vperm.slane %v766, %v942
      %v944 = vrot.slane %v943, 4
      %v945 = vsel %vm933, %v944, %v938
      %v946 = vrot.slane %v938, 4
      %v947 = vsel %vm933, %v943, %v946
      %v949 = vunpack.c.l.s4 1934713408
      %v950 = vunpack.c.0.s8 %v949
      %v951 = vperm.slane %v945, %v950
      %v953 = vunpack.c.l.s4 1934713408
      %v954 = vunpack.c.0.s8 %v953
      %v955 = vperm.slane %v947, %v954
      %v956 = vrot.slane %v951, 4
      %v957 = vsel %vm933, 0, %v956
      %v958 = vrot.slane %v955, 4
      %v959 = vsel %vm933, 0, %v958
      %v960 = vrot.slane %v776, 4
      %v961 = vsel %vm933, %v960, %v762
      %v963 = vunpack.c.l.s4 1983009808
      %v964 = vunpack.c.0.s8 %v963
      %v965 = vperm.slane %v961, %v964
      %v968 = vunpack.c.l.s4 1983009808
      %v969 = vunpack.c.0.s8 %v968
      %v970 = vperm.slane %v769, %v969
      %v971 = vrot.slane %v970, 4
      %v972 = vsel %vm933, %v971, %v965
      %v973 = vrot.slane %v965, 4
      %v974 = vsel %vm933, %v970, %v973
      %v976 = vunpack.c.l.s4 1934713408
      %v977 = vunpack.c.0.s8 %v976
      %v978 = vperm.slane %v972, %v977
      %v980 = vunpack.c.l.s4 1934713408
      %v981 = vunpack.c.0.s8 %v980
      %v982 = vperm.slane %v974, %v981
      %v983 = vrot.slane %v978, 4
      %v984 = vsel %vm933, 0, %v983
      %v985 = vrot.slane %v982, 4
      %v986 = vsel %vm933, 0, %v985
      %v987 = vrot.slane %v794, 4
      %v988 = vsel %vm933, %v987, %v780
      %v990 = vunpack.c.l.s4 1983009808
      %v991 = vunpack.c.0.s8 %v990
      %v992 = vperm.slane %v988, %v991
      %v995 = vunpack.c.l.s4 1983009808
      %v996 = vunpack.c.0.s8 %v995
      %v997 = vperm.slane %v788, %v996
      %v998 = vrot.slane %v997, 4
      %v999 = vsel %vm933, %v998, %v992
      %v1000 = vrot.slane %v992, 4
      %v1001 = vsel %vm933, %v997, %v1000
      %v1003 = vunpack.c.l.s4 1934713408
      %v1004 = vunpack.c.0.s8 %v1003
      %v1005 = vperm.slane %v999, %v1004
      %v1007 = vunpack.c.l.s4 1934713408
      %v1008 = vunpack.c.0.s8 %v1007
      %v1009 = vperm.slane %v1001, %v1008
      %v1010 = vrot.slane %v1005, 4
      %v1011 = vsel %vm933, 0, %v1010
      %v1012 = vrot.slane %v1009, 4
      %v1013 = vsel %vm933, 0, %v1012
      %v1014 = vrot.slane %v798, 4
      %v1015 = vsel %vm933, %v1014, %v784
      %v1017 = vunpack.c.l.s4 1983009808
      %v1018 = vunpack.c.0.s8 %v1017
      %v1019 = vperm.slane %v1015, %v1018
      %v1022 = vunpack.c.l.s4 1983009808
      %v1023 = vunpack.c.0.s8 %v1022
      %v1024 = vperm.slane %v791, %v1023
      %v1025 = vrot.slane %v1024, 4
      %v1026 = vsel %vm933, %v1025, %v1019
      %v1027 = vrot.slane %v1019, 4
      %v1028 = vsel %vm933, %v1024, %v1027
      %v1030 = vunpack.c.l.s4 1934713408
      %v1031 = vunpack.c.0.s8 %v1030
      %v1032 = vperm.slane %v1026, %v1031
      %v1034 = vunpack.c.l.s4 1934713408
      %v1035 = vunpack.c.0.s8 %v1034
      %v1036 = vperm.slane %v1028, %v1035
      %v1037 = vrot.slane %v1032, 4
      %v1038 = vsel %vm933, 0, %v1037
      %v1039 = vrot.slane %v1036, 4
      %v1040 = vsel %vm933, 0, %v1039
      %v1041 = vrot.slane %v816, 4
      %v1042 = vsel %vm933, %v1041, %v802
      %v1044 = vunpack.c.l.s4 1983009808
      %v1045 = vunpack.c.0.s8 %v1044
      %v1046 = vperm.slane %v1042, %v1045
      %v1049 = vunpack.c.l.s4 1983009808
      %v1050 = vunpack.c.0.s8 %v1049
      %v1051 = vperm.slane %v810, %v1050
      %v1052 = vrot.slane %v1051, 4
      %v1053 = vsel %vm933, %v1052, %v1046
      %v1054 = vrot.slane %v1046, 4
      %v1055 = vsel %vm933, %v1051, %v1054
      %v1057 = vunpack.c.l.s4 1934713408
      %v1058 = vunpack.c.0.s8 %v1057
      %v1059 = vperm.slane %v1053, %v1058
      %v1061 = vunpack.c.l.s4 1934713408
      %v1062 = vunpack.c.0.s8 %v1061
      %v1063 = vperm.slane %v1055, %v1062
      %v1064 = vrot.slane %v1059, 4
      %v1065 = vsel %vm933, 0, %v1064
      %v1066 = vrot.slane %v1063, 4
      %v1067 = vsel %vm933, 0, %v1066
      %v1068 = vrot.slane %v820, 4
      %v1069 = vsel %vm933, %v1068, %v806
      %v1071 = vunpack.c.l.s4 1983009808
      %v1072 = vunpack.c.0.s8 %v1071
      %v1073 = vperm.slane %v1069, %v1072
      %v1076 = vunpack.c.l.s4 1983009808
      %v1077 = vunpack.c.0.s8 %v1076
      %v1078 = vperm.slane %v813, %v1077
      %v1079 = vrot.slane %v1078, 4
      %v1080 = vsel %vm933, %v1079, %v1073
      %v1081 = vrot.slane %v1073, 4
      %v1082 = vsel %vm933, %v1078, %v1081
      %v1084 = vunpack.c.l.s4 1934713408
      %v1085 = vunpack.c.0.s8 %v1084
      %v1086 = vperm.slane %v1080, %v1085
      %v1088 = vunpack.c.l.s4 1934713408
      %v1089 = vunpack.c.0.s8 %v1088
      %v1090 = vperm.slane %v1082, %v1089
      %v1091 = vrot.slane %v1086, 4
      %v1092 = vsel %vm933, 0, %v1091
      %v1093 = vrot.slane %v1090, 4
      %v1094 = vsel %vm933, 0, %v1093
      %v1095 = vrot.slane %v838, 4
      %v1096 = vsel %vm933, %v1095, %v824
      %v1098 = vunpack.c.l.s4 1983009808
      %v1099 = vunpack.c.0.s8 %v1098
      %v1100 = vperm.slane %v1096, %v1099
      %v1103 = vunpack.c.l.s4 1983009808
      %v1104 = vunpack.c.0.s8 %v1103
      %v1105 = vperm.slane %v832, %v1104
      %v1106 = vrot.slane %v1105, 4
      %v1107 = vsel %vm933, %v1106, %v1100
      %v1108 = vrot.slane %v1100, 4
      %v1109 = vsel %vm933, %v1105, %v1108
      %v1111 = vunpack.c.l.s4 1934713408
      %v1112 = vunpack.c.0.s8 %v1111
      %v1113 = vperm.slane %v1107, %v1112
      %v1115 = vunpack.c.l.s4 1934713408
      %v1116 = vunpack.c.0.s8 %v1115
      %v1117 = vperm.slane %v1109, %v1116
      %v1118 = vrot.slane %v1113, 4
      %v1119 = vsel %vm933, 0, %v1118
      %v1120 = vrot.slane %v1117, 4
      %v1121 = vsel %vm933, 0, %v1120
      %v1122 = vrot.slane %v842, 4
      %v1123 = vsel %vm933, %v1122, %v828
      %v1125 = vunpack.c.l.s4 1983009808
      %v1126 = vunpack.c.0.s8 %v1125
      %v1127 = vperm.slane %v1123, %v1126
      %v1130 = vunpack.c.l.s4 1983009808
      %v1131 = vunpack.c.0.s8 %v1130
      %v1132 = vperm.slane %v835, %v1131
      %v1133 = vrot.slane %v1132, 4
      %v1134 = vsel %vm933, %v1133, %v1127
      %v1135 = vrot.slane %v1127, 4
      %v1136 = vsel %vm933, %v1132, %v1135
      %v1138 = vunpack.c.l.s4 1934713408
      %v1139 = vunpack.c.0.s8 %v1138
      %v1140 = vperm.slane %v1134, %v1139
      %v1142 = vunpack.c.l.s4 1934713408
      %v1143 = vunpack.c.0.s8 %v1142
      %v1144 = vperm.slane %v1136, %v1143
      %v1145 = vrot.slane %v1140, 4
      %v1146 = vsel %vm933, 0, %v1145
      %v1147 = vrot.slane %v1144, 4
      %v1148 = vsel %vm933, 0, %v1147
      %v1149 = vrot.slane %v860, 4
      %v1150 = vsel %vm933, %v1149, %v846
      %v1152 = vunpack.c.l.s4 1983009808
      %v1153 = vunpack.c.0.s8 %v1152
      %v1154 = vperm.slane %v1150, %v1153
      %v1157 = vunpack.c.l.s4 1983009808
      %v1158 = vunpack.c.0.s8 %v1157
      %v1159 = vperm.slane %v854, %v1158
      %v1160 = vrot.slane %v1159, 4
      %v1161 = vsel %vm933, %v1160, %v1154
      %v1162 = vrot.slane %v1154, 4
      %v1163 = vsel %vm933, %v1159, %v1162
      %v1165 = vunpack.c.l.s4 1934713408
      %v1166 = vunpack.c.0.s8 %v1165
      %v1167 = vperm.slane %v1161, %v1166
      %v1169 = vunpack.c.l.s4 1934713408
      %v1170 = vunpack.c.0.s8 %v1169
      %v1171 = vperm.slane %v1163, %v1170
      %v1172 = vrot.slane %v1167, 4
      %v1173 = vsel %vm933, 0, %v1172
      %v1174 = vrot.slane %v1171, 4
      %v1175 = vsel %vm933, 0, %v1174
      %v1176 = vrot.slane %v864, 4
      %v1177 = vsel %vm933, %v1176, %v850
      %v1179 = vunpack.c.l.s4 1983009808
      %v1180 = vunpack.c.0.s8 %v1179
      %v1181 = vperm.slane %v1177, %v1180
      %v1184 = vunpack.c.l.s4 1983009808
      %v1185 = vunpack.c.0.s8 %v1184
      %v1186 = vperm.slane %v857, %v1185
      %v1187 = vrot.slane %v1186, 4
      %v1188 = vsel %vm933, %v1187, %v1181
      %v1189 = vrot.slane %v1181, 4
      %v1190 = vsel %vm933, %v1186, %v1189
      %v1192 = vunpack.c.l.s4 1934713408
      %v1193 = vunpack.c.0.s8 %v1192
      %v1194 = vperm.slane %v1188, %v1193
      %v1196 = vunpack.c.l.s4 1934713408
      %v1197 = vunpack.c.0.s8 %v1196
      %v1198 = vperm.slane %v1190, %v1197
      %v1199 = vrot.slane %v1194, 4
      %v1200 = vsel %vm933, 0, %v1199
      %v1201 = vrot.slane %v1198, 4
      %v1202 = vsel %vm933, 0, %v1201
      %v1203 = vrot.slane %v882, 4
      %v1204 = vsel %vm933, %v1203, %v868
      %v1206 = vunpack.c.l.s4 1983009808
      %v1207 = vunpack.c.0.s8 %v1206
      %v1208 = vperm.slane %v1204, %v1207
      %v1211 = vunpack.c.l.s4 1983009808
      %v1212 = vunpack.c.0.s8 %v1211
      %v1213 = vperm.slane %v876, %v1212
      %v1214 = vrot.slane %v1213, 4
      %v1215 = vsel %vm933, %v1214, %v1208
      %v1216 = vrot.slane %v1208, 4
      %v1217 = vsel %vm933, %v1213, %v1216
      %v1219 = vunpack.c.l.s4 1934713408
      %v1220 = vunpack.c.0.s8 %v1219
      %v1221 = vperm.slane %v1215, %v1220
      %v1223 = vunpack.c.l.s4 1934713408
      %v1224 = vunpack.c.0.s8 %v1223
      %v1225 = vperm.slane %v1217, %v1224
      %v1226 = vrot.slane %v1221, 4
      %v1227 = vsel %vm933, 0, %v1226
      %v1228 = vrot.slane %v1225, 4
      %v1229 = vsel %vm933, 0, %v1228
      %v1230 = vrot.slane %v886, 4
      %v1231 = vsel %vm933, %v1230, %v872
      %v1233 = vunpack.c.l.s4 1983009808
      %v1234 = vunpack.c.0.s8 %v1233
      %v1235 = vperm.slane %v1231, %v1234
      %v1238 = vunpack.c.l.s4 1983009808
      %v1239 = vunpack.c.0.s8 %v1238
      %v1240 = vperm.slane %v879, %v1239
      %v1241 = vrot.slane %v1240, 4
      %v1242 = vsel %vm933, %v1241, %v1235
      %v1243 = vrot.slane %v1235, 4
      %v1244 = vsel %vm933, %v1240, %v1243
      %v1246 = vunpack.c.l.s4 1934713408
      %v1247 = vunpack.c.0.s8 %v1246
      %v1248 = vperm.slane %v1242, %v1247
      %v1250 = vunpack.c.l.s4 1934713408
      %v1251 = vunpack.c.0.s8 %v1250
      %v1252 = vperm.slane %v1244, %v1251
      %v1253 = vrot.slane %v1248, 4
      %v1254 = vsel %vm933, 0, %v1253
      %v1255 = vrot.slane %v1252, 4
      %v1256 = vsel %vm933, 0, %v1255
      %v1257 = vrot.slane %v904, 4
      %v1258 = vsel %vm933, %v1257, %v890
      %v1260 = vunpack.c.l.s4 1983009808
      %v1261 = vunpack.c.0.s8 %v1260
      %v1262 = vperm.slane %v1258, %v1261
      %v1265 = vunpack.c.l.s4 1983009808
      %v1266 = vunpack.c.0.s8 %v1265
      %v1267 = vperm.slane %v898, %v1266
      %v1268 = vrot.slane %v1267, 4
      %v1269 = vsel %vm933, %v1268, %v1262
      %v1270 = vrot.slane %v1262, 4
      %v1271 = vsel %vm933, %v1267, %v1270
      %v1273 = vunpack.c.l.s4 1934713408
      %v1274 = vunpack.c.0.s8 %v1273
      %v1275 = vperm.slane %v1269, %v1274
      %v1277 = vunpack.c.l.s4 1934713408
      %v1278 = vunpack.c.0.s8 %v1277
      %v1279 = vperm.slane %v1271, %v1278
      %v1280 = vrot.slane %v1275, 4
      %v1281 = vsel %vm933, 0, %v1280
      %v1282 = vrot.slane %v1279, 4
      %v1283 = vsel %vm933, 0, %v1282
      %v1284 = vrot.slane %v908, 4
      %v1285 = vsel %vm933, %v1284, %v894
      %v1287 = vunpack.c.l.s4 1983009808
      %v1288 = vunpack.c.0.s8 %v1287
      %v1289 = vperm.slane %v1285, %v1288
      %v1292 = vunpack.c.l.s4 1983009808
      %v1293 = vunpack.c.0.s8 %v1292
      %v1294 = vperm.slane %v901, %v1293
      %v1295 = vrot.slane %v1294, 4
      %v1296 = vsel %vm933, %v1295, %v1289
      %v1297 = vrot.slane %v1289, 4
      %v1298 = vsel %vm933, %v1294, %v1297
      %v1300 = vunpack.c.l.s4 1934713408
      %v1301 = vunpack.c.0.s8 %v1300
      %v1302 = vperm.slane %v1296, %v1301
      %v1304 = vunpack.c.l.s4 1934713408
      %v1305 = vunpack.c.0.s8 %v1304
      %v1306 = vperm.slane %v1298, %v1305
      %v1307 = vrot.slane %v1302, 4
      %v1308 = vsel %vm933, 0, %v1307
      %v1309 = vrot.slane %v1306, 4
      %v1310 = vsel %vm933, 0, %v1309
      %v1311 = vrot.slane %v926, 4
      %v1312 = vsel %vm933, %v1311, %v912
      %v1314 = vunpack.c.l.s4 1983009808
      %v1315 = vunpack.c.0.s8 %v1314
      %v1316 = vperm.slane %v1312, %v1315
      %v1319 = vunpack.c.l.s4 1983009808
      %v1320 = vunpack.c.0.s8 %v1319
      %v1321 = vperm.slane %v920, %v1320
      %v1322 = vrot.slane %v1321, 4
      %v1323 = vsel %vm933, %v1322, %v1316
      %v1324 = vrot.slane %v1316, 4
      %v1325 = vsel %vm933, %v1321, %v1324
      %v1327 = vunpack.c.l.s4 1934713408
      %v1328 = vunpack.c.0.s8 %v1327
      %v1329 = vperm.slane %v1323, %v1328
      %v1331 = vunpack.c.l.s4 1934713408
      %v1332 = vunpack.c.0.s8 %v1331
      %v1333 = vperm.slane %v1325, %v1332
      %v1334 = vrot.slane %v1329, 4
      %v1335 = vsel %vm933, 0, %v1334
      %v1336 = vrot.slane %v1333, 4
      %v1337 = vsel %vm933, 0, %v1336
      %v1338 = vrot.slane %v930, 4
      %v1339 = vsel %vm933, %v1338, %v916
      %v1341 = vunpack.c.l.s4 1983009808
      %v1342 = vunpack.c.0.s8 %v1341
      %v1343 = vperm.slane %v1339, %v1342
      %v1346 = vunpack.c.l.s4 1983009808
      %v1347 = vunpack.c.0.s8 %v1346
      %v1348 = vperm.slane %v923, %v1347
      %v1349 = vrot.slane %v1348, 4
      %v1350 = vsel %vm933, %v1349, %v1343
      %v1351 = vrot.slane %v1343, 4
      %v1352 = vsel %vm933, %v1348, %v1351
      %v1354 = vunpack.c.l.s4 1934713408
      %v1355 = vunpack.c.0.s8 %v1354
      %v1356 = vperm.slane %v1350, %v1355
      %v1358 = vunpack.c.l.s4 1934713408
      %v1359 = vunpack.c.0.s8 %v1358
      %v1360 = vperm.slane %v1352, %v1359
      %v1361 = vrot.slane %v1356, 4
      %v1362 = vsel %vm933, 0, %v1361
      %v1363 = vrot.slane %v1360, 4
      %v1364 = vsel %vm933, 0, %v1363
      %v1365 = vsel %vm933, %v958, %v951
      %v1367 = vunpack.c.l.s4 1983009808
      %v1368 = vunpack.c.0.s8 %v1367
      %v1369 = vperm.slane %v1365, %v1368
      %v1370 = vrot.slane %v959, 4
      %v1371 = vsel %vm933, %v1370, %v957
      %v1373 = vunpack.c.l.s4 1983009808
      %v1374 = vunpack.c.0.s8 %v1373
      %v1375 = vperm.slane %v1371, %v1374
      %v1376 = vrot.slane %v1375, 4
      %v1377 = vsel %vm933, %v1376, %v1369
      %v1378 = vrot.slane %v1369, 4
      %v1379 = vsel %vm933, %v1375, %v1378
      %v1381 = vunpack.c.l.s4 1934713408
      %v1382 = vunpack.c.0.s8 %v1381
      %v1383 = vperm.slane %v1377, %v1382
      %v1384 = vrot.slane %v1383, 4
      %v1385 = vsel %vm933, 0, %v1384
      %v1387 = vunpack.c.l.s4 1934713408
      %v1388 = vunpack.c.0.s8 %v1387
      %v1389 = vperm.slane %v1379, %v1388
      %v1390 = vsel %vm933, %v985, %v978
      %v1392 = vunpack.c.l.s4 1983009808
      %v1393 = vunpack.c.0.s8 %v1392
      %v1394 = vperm.slane %v1390, %v1393
      %v1395 = vrot.slane %v986, 4
      %v1396 = vsel %vm933, %v1395, %v984
      %v1398 = vunpack.c.l.s4 1983009808
      %v1399 = vunpack.c.0.s8 %v1398
      %v1400 = vperm.slane %v1396, %v1399
      %v1401 = vrot.slane %v1400, 4
      %v1402 = vsel %vm933, %v1401, %v1394
      %v1403 = vrot.slane %v1394, 4
      %v1404 = vsel %vm933, %v1400, %v1403
      %v1406 = vunpack.c.l.s4 1934713408
      %v1407 = vunpack.c.0.s8 %v1406
      %v1408 = vperm.slane %v1402, %v1407
      %v1409 = vrot.slane %v1408, 4
      %v1410 = vsel %vm933, 0, %v1409
      %v1412 = vunpack.c.l.s4 1934713408
      %v1413 = vunpack.c.0.s8 %v1412
      %v1414 = vperm.slane %v1404, %v1413
      %v1415 = vsel %vm933, %v1012, %v1005
      %v1417 = vunpack.c.l.s4 1983009808
      %v1418 = vunpack.c.0.s8 %v1417
      %v1419 = vperm.slane %v1415, %v1418
      %v1420 = vrot.slane %v1013, 4
      %v1421 = vsel %vm933, %v1420, %v1011
      %v1423 = vunpack.c.l.s4 1983009808
      %v1424 = vunpack.c.0.s8 %v1423
      %v1425 = vperm.slane %v1421, %v1424
      %v1426 = vrot.slane %v1425, 4
      %v1427 = vsel %vm933, %v1426, %v1419
      %v1428 = vrot.slane %v1419, 4
      %v1429 = vsel %vm933, %v1425, %v1428
      %v1431 = vunpack.c.l.s4 1934713408
      %v1432 = vunpack.c.0.s8 %v1431
      %v1433 = vperm.slane %v1427, %v1432
      %v1434 = vrot.slane %v1433, 4
      %v1435 = vsel %vm933, 0, %v1434
      %v1437 = vunpack.c.l.s4 1934713408
      %v1438 = vunpack.c.0.s8 %v1437
      %v1439 = vperm.slane %v1429, %v1438
      %v1440 = vsel %vm933, %v1039, %v1032
      %v1442 = vunpack.c.l.s4 1983009808
      %v1443 = vunpack.c.0.s8 %v1442
      %v1444 = vperm.slane %v1440, %v1443
      %v1445 = vrot.slane %v1040, 4
      %v1446 = vsel %vm933, %v1445, %v1038
      %v1448 = vunpack.c.l.s4 1983009808
      %v1449 = vunpack.c.0.s8 %v1448
      %v1450 = vperm.slane %v1446, %v1449
      %v1451 = vrot.slane %v1450, 4
      %v1452 = vsel %vm933, %v1451, %v1444
      %v1453 = vrot.slane %v1444, 4
      %v1454 = vsel %vm933, %v1450, %v1453
      %v1456 = vunpack.c.l.s4 1934713408
      %v1457 = vunpack.c.0.s8 %v1456
      %v1458 = vperm.slane %v1452, %v1457
      %v1459 = vrot.slane %v1458, 4
      %v1460 = vsel %vm933, 0, %v1459
      %v1462 = vunpack.c.l.s4 1934713408
      %v1463 = vunpack.c.0.s8 %v1462
      %v1464 = vperm.slane %v1454, %v1463
      %v1465 = vsel %vm933, %v1066, %v1059
      %v1467 = vunpack.c.l.s4 1983009808
      %v1468 = vunpack.c.0.s8 %v1467
      %v1469 = vperm.slane %v1465, %v1468
      %v1470 = vrot.slane %v1067, 4
      %v1471 = vsel %vm933, %v1470, %v1065
      %v1473 = vunpack.c.l.s4 1983009808
      %v1474 = vunpack.c.0.s8 %v1473
      %v1475 = vperm.slane %v1471, %v1474
      %v1476 = vrot.slane %v1475, 4
      %v1477 = vsel %vm933, %v1476, %v1469
      %v1478 = vrot.slane %v1469, 4
      %v1479 = vsel %vm933, %v1475, %v1478
      %v1481 = vunpack.c.l.s4 1934713408
      %v1482 = vunpack.c.0.s8 %v1481
      %v1483 = vperm.slane %v1477, %v1482
      %v1484 = vrot.slane %v1483, 4
      %v1485 = vsel %vm933, 0, %v1484
      %v1487 = vunpack.c.l.s4 1934713408
      %v1488 = vunpack.c.0.s8 %v1487
      %v1489 = vperm.slane %v1479, %v1488
      %v1490 = vsel %vm933, %v1093, %v1086
      %v1492 = vunpack.c.l.s4 1983009808
      %v1493 = vunpack.c.0.s8 %v1492
      %v1494 = vperm.slane %v1490, %v1493
      %v1495 = vrot.slane %v1094, 4
      %v1496 = vsel %vm933, %v1495, %v1092
      %v1498 = vunpack.c.l.s4 1983009808
      %v1499 = vunpack.c.0.s8 %v1498
      %v1500 = vperm.slane %v1496, %v1499
      %v1501 = vrot.slane %v1500, 4
      %v1502 = vsel %vm933, %v1501, %v1494
      %v1503 = vrot.slane %v1494, 4
      %v1504 = vsel %vm933, %v1500, %v1503
      %v1506 = vunpack.c.l.s4 1934713408
      %v1507 = vunpack.c.0.s8 %v1506
      %v1508 = vperm.slane %v1502, %v1507
      %v1509 = vrot.slane %v1508, 4
      %v1510 = vsel %vm933, 0, %v1509
      %v1512 = vunpack.c.l.s4 1934713408
      %v1513 = vunpack.c.0.s8 %v1512
      %v1514 = vperm.slane %v1504, %v1513
      %v1515 = vsel %vm933, %v1120, %v1113
      %v1517 = vunpack.c.l.s4 1983009808
      %v1518 = vunpack.c.0.s8 %v1517
      %v1519 = vperm.slane %v1515, %v1518
      %v1520 = vrot.slane %v1121, 4
      %v1521 = vsel %vm933, %v1520, %v1119
      %v1523 = vunpack.c.l.s4 1983009808
      %v1524 = vunpack.c.0.s8 %v1523
      %v1525 = vperm.slane %v1521, %v1524
      %v1526 = vrot.slane %v1525, 4
      %v1527 = vsel %vm933, %v1526, %v1519
      %v1528 = vrot.slane %v1519, 4
      %v1529 = vsel %vm933, %v1525, %v1528
      %v1531 = vunpack.c.l.s4 1934713408
      %v1532 = vunpack.c.0.s8 %v1531
      %v1533 = vperm.slane %v1527, %v1532
      %v1534 = vrot.slane %v1533, 4
      %v1535 = vsel %vm933, 0, %v1534
      %v1537 = vunpack.c.l.s4 1934713408
      %v1538 = vunpack.c.0.s8 %v1537
      %v1539 = vperm.slane %v1529, %v1538
      %v1540 = vsel %vm933, %v1147, %v1140
      %v1542 = vunpack.c.l.s4 1983009808
      %v1543 = vunpack.c.0.s8 %v1542
      %v1544 = vperm.slane %v1540, %v1543
      %v1545 = vrot.slane %v1148, 4
      %v1546 = vsel %vm933, %v1545, %v1146
      %v1548 = vunpack.c.l.s4 1983009808
      %v1549 = vunpack.c.0.s8 %v1548
      %v1550 = vperm.slane %v1546, %v1549
      %v1551 = vrot.slane %v1550, 4
      %v1552 = vsel %vm933, %v1551, %v1544
      %v1553 = vrot.slane %v1544, 4
      %v1554 = vsel %vm933, %v1550, %v1553
      %v1556 = vunpack.c.l.s4 1934713408
      %v1557 = vunpack.c.0.s8 %v1556
      %v1558 = vperm.slane %v1552, %v1557
      %v1559 = vrot.slane %v1558, 4
      %v1560 = vsel %vm933, 0, %v1559
      %v1562 = vunpack.c.l.s4 1934713408
      %v1563 = vunpack.c.0.s8 %v1562
      %v1564 = vperm.slane %v1554, %v1563
      %v1565 = vsel %vm933, %v1174, %v1167
      %v1567 = vunpack.c.l.s4 1983009808
      %v1568 = vunpack.c.0.s8 %v1567
      %v1569 = vperm.slane %v1565, %v1568
      %v1570 = vrot.slane %v1175, 4
      %v1571 = vsel %vm933, %v1570, %v1173
      %v1573 = vunpack.c.l.s4 1983009808
      %v1574 = vunpack.c.0.s8 %v1573
      %v1575 = vperm.slane %v1571, %v1574
      %v1576 = vrot.slane %v1575, 4
      %v1577 = vsel %vm933, %v1576, %v1569
      %v1578 = vrot.slane %v1569, 4
      %v1579 = vsel %vm933, %v1575, %v1578
      %v1581 = vunpack.c.l.s4 1934713408
      %v1582 = vunpack.c.0.s8 %v1581
      %v1583 = vperm.slane %v1577, %v1582
      %v1584 = vrot.slane %v1583, 4
      %v1585 = vsel %vm933, 0, %v1584
      %v1587 = vunpack.c.l.s4 1934713408
      %v1588 = vunpack.c.0.s8 %v1587
      %v1589 = vperm.slane %v1579, %v1588
      %v1590 = vsel %vm933, %v1201, %v1194
      %v1592 = vunpack.c.l.s4 1983009808
      %v1593 = vunpack.c.0.s8 %v1592
      %v1594 = vperm.slane %v1590, %v1593
      %v1595 = vrot.slane %v1202, 4
      %v1596 = vsel %vm933, %v1595, %v1200
      %v1598 = vunpack.c.l.s4 1983009808
      %v1599 = vunpack.c.0.s8 %v1598
      %v1600 = vperm.slane %v1596, %v1599
      %v1601 = vrot.slane %v1600, 4
      %v1602 = vsel %vm933, %v1601, %v1594
      %v1603 = vrot.slane %v1594, 4
      %v1604 = vsel %vm933, %v1600, %v1603
      %v1606 = vunpack.c.l.s4 1934713408
      %v1607 = vunpack.c.0.s8 %v1606
      %v1608 = vperm.slane %v1602, %v1607
      %v1609 = vrot.slane %v1608, 4
      %v1610 = vsel %vm933, 0, %v1609
      %v1612 = vunpack.c.l.s4 1934713408
      %v1613 = vunpack.c.0.s8 %v1612
      %v1614 = vperm.slane %v1604, %v1613
      %v1615 = vsel %vm933, %v1228, %v1221
      %v1617 = vunpack.c.l.s4 1983009808
      %v1618 = vunpack.c.0.s8 %v1617
      %v1619 = vperm.slane %v1615, %v1618
      %v1620 = vrot.slane %v1229, 4
      %v1621 = vsel %vm933, %v1620, %v1227
      %v1623 = vunpack.c.l.s4 1983009808
      %v1624 = vunpack.c.0.s8 %v1623
      %v1625 = vperm.slane %v1621, %v1624
      %v1626 = vrot.slane %v1625, 4
      %v1627 = vsel %vm933, %v1626, %v1619
      %v1628 = vrot.slane %v1619, 4
      %v1629 = vsel %vm933, %v1625, %v1628
      %v1631 = vunpack.c.l.s4 1934713408
      %v1632 = vunpack.c.0.s8 %v1631
      %v1633 = vperm.slane %v1627, %v1632
      %v1634 = vrot.slane %v1633, 4
      %v1635 = vsel %vm933, 0, %v1634
      %v1637 = vunpack.c.l.s4 1934713408
      %v1638 = vunpack.c.0.s8 %v1637
      %v1639 = vperm.slane %v1629, %v1638
      %v1640 = vsel %vm933, %v1255, %v1248
      %v1642 = vunpack.c.l.s4 1983009808
      %v1643 = vunpack.c.0.s8 %v1642
      %v1644 = vperm.slane %v1640, %v1643
      %v1645 = vrot.slane %v1256, 4
      %v1646 = vsel %vm933, %v1645, %v1254
      %v1648 = vunpack.c.l.s4 1983009808
      %v1649 = vunpack.c.0.s8 %v1648
      %v1650 = vperm.slane %v1646, %v1649
      %v1651 = vrot.slane %v1650, 4
      %v1652 = vsel %vm933, %v1651, %v1644
      %v1653 = vrot.slane %v1644, 4
      %v1654 = vsel %vm933, %v1650, %v1653
      %v1656 = vunpack.c.l.s4 1934713408
      %v1657 = vunpack.c.0.s8 %v1656
      %v1658 = vperm.slane %v1652, %v1657
      %v1659 = vrot.slane %v1658, 4
      %v1660 = vsel %vm933, 0, %v1659
      %v1662 = vunpack.c.l.s4 1934713408
      %v1663 = vunpack.c.0.s8 %v1662
      %v1664 = vperm.slane %v1654, %v1663
      %v1665 = vsel %vm933, %v1282, %v1275
      %v1667 = vunpack.c.l.s4 1983009808
      %v1668 = vunpack.c.0.s8 %v1667
      %v1669 = vperm.slane %v1665, %v1668
      %v1670 = vrot.slane %v1283, 4
      %v1671 = vsel %vm933, %v1670, %v1281
      %v1673 = vunpack.c.l.s4 1983009808
      %v1674 = vunpack.c.0.s8 %v1673
      %v1675 = vperm.slane %v1671, %v1674
      %v1676 = vrot.slane %v1675, 4
      %v1677 = vsel %vm933, %v1676, %v1669
      %v1678 = vrot.slane %v1669, 4
      %v1679 = vsel %vm933, %v1675, %v1678
      %v1681 = vunpack.c.l.s4 1934713408
      %v1682 = vunpack.c.0.s8 %v1681
      %v1683 = vperm.slane %v1677, %v1682
      %v1684 = vrot.slane %v1683, 4
      %v1685 = vsel %vm933, 0, %v1684
      %v1687 = vunpack.c.l.s4 1934713408
      %v1688 = vunpack.c.0.s8 %v1687
      %v1689 = vperm.slane %v1679, %v1688
      %v1690 = vsel %vm933, %v1309, %v1302
      %v1692 = vunpack.c.l.s4 1983009808
      %v1693 = vunpack.c.0.s8 %v1692
      %v1694 = vperm.slane %v1690, %v1693
      %v1695 = vrot.slane %v1310, 4
      %v1696 = vsel %vm933, %v1695, %v1308
      %v1698 = vunpack.c.l.s4 1983009808
      %v1699 = vunpack.c.0.s8 %v1698
      %v1700 = vperm.slane %v1696, %v1699
      %v1701 = vrot.slane %v1700, 4
      %v1702 = vsel %vm933, %v1701, %v1694
      %v1703 = vrot.slane %v1694, 4
      %v1704 = vsel %vm933, %v1700, %v1703
      %v1706 = vunpack.c.l.s4 1934713408
      %v1707 = vunpack.c.0.s8 %v1706
      %v1708 = vperm.slane %v1702, %v1707
      %v1709 = vrot.slane %v1708, 4
      %v1710 = vsel %vm933, 0, %v1709
      %v1712 = vunpack.c.l.s4 1934713408
      %v1713 = vunpack.c.0.s8 %v1712
      %v1714 = vperm.slane %v1704, %v1713
      %v1715 = vsel %vm933, %v1336, %v1329
      %v1717 = vunpack.c.l.s4 1983009808
      %v1718 = vunpack.c.0.s8 %v1717
      %v1719 = vperm.slane %v1715, %v1718
      %v1720 = vrot.slane %v1337, 4
      %v1721 = vsel %vm933, %v1720, %v1335
      %v1723 = vunpack.c.l.s4 1983009808
      %v1724 = vunpack.c.0.s8 %v1723
      %v1725 = vperm.slane %v1721, %v1724
      %v1726 = vrot.slane %v1725, 4
      %v1727 = vsel %vm933, %v1726, %v1719
      %v1728 = vrot.slane %v1719, 4
      %v1729 = vsel %vm933, %v1725, %v1728
      %v1731 = vunpack.c.l.s4 1934713408
      %v1732 = vunpack.c.0.s8 %v1731
      %v1733 = vperm.slane %v1727, %v1732
      %v1734 = vrot.slane %v1733, 4
      %v1735 = vsel %vm933, 0, %v1734
      %v1737 = vunpack.c.l.s4 1934713408
      %v1738 = vunpack.c.0.s8 %v1737
      %v1739 = vperm.slane %v1729, %v1738
      %v1740 = vsel %vm933, %v1363, %v1356
      %v1742 = vunpack.c.l.s4 1983009808
      %v1743 = vunpack.c.0.s8 %v1742
      %v1744 = vperm.slane %v1740, %v1743
      %v1745 = vrot.slane %v1364, 4
      %v1746 = vsel %vm933, %v1745, %v1362
      %v1748 = vunpack.c.l.s4 1983009808
      %v1749 = vunpack.c.0.s8 %v1748
      %v1750 = vperm.slane %v1746, %v1749
      %v1751 = vrot.slane %v1750, 4
      %v1752 = vsel %vm933, %v1751, %v1744
      %v1753 = vrot.slane %v1744, 4
      %v1754 = vsel %vm933, %v1750, %v1753
      %v1756 = vunpack.c.l.s4 1934713408
      %v1757 = vunpack.c.0.s8 %v1756
      %v1758 = vperm.slane %v1752, %v1757
      %v1759 = vrot.slane %v1758, 4
      %v1760 = vsel %vm933, 0, %v1759
      %v1762 = vunpack.c.l.s4 1934713408
      %v1763 = vunpack.c.0.s8 %v1762
      %v1764 = vperm.slane %v1754, %v1763
      %v1767 = vpack.i.b16 %v1408, %v1383
      %v1768 = vshrl.u32 %v1383, 16
      %v1769 = vshrl.u32 %v1408, 16
      %v1770 = vpack.i.b16 %v1769, %v1768
      %v1773 = vpack.i.b16 %v1410, %v1385
      %v1774 = vshrl.u32 %v1385, 16
      %v1775 = vshrl.u32 %v1410, 16
      %v1776 = vpack.i.b16 %v1775, %v1774
      %v1779 = vpack.i.b16 %v1414, %v1389
      %v1780 = vshrl.u32 %v1389, 16
      %v1781 = vshrl.u32 %v1414, 16
      %v1782 = vpack.i.b16 %v1781, %v1780
      %v1785 = vpack.i.b16 %v1458, %v1433
      %v1786 = vshrl.u32 %v1433, 16
      %v1787 = vshrl.u32 %v1458, 16
      %v1788 = vpack.i.b16 %v1787, %v1786
      %v1791 = vpack.i.b16 %v1460, %v1435
      %v1792 = vshrl.u32 %v1435, 16
      %v1793 = vshrl.u32 %v1460, 16
      %v1794 = vpack.i.b16 %v1793, %v1792
      %v1797 = vpack.i.b16 %v1464, %v1439
      %v1798 = vshrl.u32 %v1439, 16
      %v1799 = vshrl.u32 %v1464, 16
      %v1800 = vpack.i.b16 %v1799, %v1798
      %v1803 = vpack.i.b16 %v1508, %v1483
      %v1804 = vshrl.u32 %v1483, 16
      %v1805 = vshrl.u32 %v1508, 16
      %v1806 = vpack.i.b16 %v1805, %v1804
      %v1809 = vpack.i.b16 %v1510, %v1485
      %v1810 = vshrl.u32 %v1485, 16
      %v1811 = vshrl.u32 %v1510, 16
      %v1812 = vpack.i.b16 %v1811, %v1810
      %v1815 = vpack.i.b16 %v1514, %v1489
      %v1816 = vshrl.u32 %v1489, 16
      %v1817 = vshrl.u32 %v1514, 16
      %v1818 = vpack.i.b16 %v1817, %v1816
      %v1821 = vpack.i.b16 %v1558, %v1533
      %v1822 = vshrl.u32 %v1533, 16
      %v1823 = vshrl.u32 %v1558, 16
      %v1824 = vpack.i.b16 %v1823, %v1822
      %v1827 = vpack.i.b16 %v1560, %v1535
      %v1828 = vshrl.u32 %v1535, 16
      %v1829 = vshrl.u32 %v1560, 16
      %v1830 = vpack.i.b16 %v1829, %v1828
      %v1833 = vpack.i.b16 %v1564, %v1539
      %v1834 = vshrl.u32 %v1539, 16
      %v1835 = vshrl.u32 %v1564, 16
      %v1836 = vpack.i.b16 %v1835, %v1834
      %v1839 = vpack.i.b16 %v1608, %v1583
      %v1840 = vshrl.u32 %v1583, 16
      %v1841 = vshrl.u32 %v1608, 16
      %v1842 = vpack.i.b16 %v1841, %v1840
      %v1845 = vpack.i.b16 %v1610, %v1585
      %v1846 = vshrl.u32 %v1585, 16
      %v1847 = vshrl.u32 %v1610, 16
      %v1848 = vpack.i.b16 %v1847, %v1846
      %v1851 = vpack.i.b16 %v1614, %v1589
      %v1852 = vshrl.u32 %v1589, 16
      %v1853 = vshrl.u32 %v1614, 16
      %v1854 = vpack.i.b16 %v1853, %v1852
      %v1857 = vpack.i.b16 %v1658, %v1633
      %v1858 = vshrl.u32 %v1633, 16
      %v1859 = vshrl.u32 %v1658, 16
      %v1860 = vpack.i.b16 %v1859, %v1858
      %v1863 = vpack.i.b16 %v1660, %v1635
      %v1864 = vshrl.u32 %v1635, 16
      %v1865 = vshrl.u32 %v1660, 16
      %v1866 = vpack.i.b16 %v1865, %v1864
      %v1869 = vpack.i.b16 %v1664, %v1639
      %v1870 = vshrl.u32 %v1639, 16
      %v1871 = vshrl.u32 %v1664, 16
      %v1872 = vpack.i.b16 %v1871, %v1870
      %v1875 = vpack.i.b16 %v1708, %v1683
      %v1876 = vshrl.u32 %v1683, 16
      %v1877 = vshrl.u32 %v1708, 16
      %v1878 = vpack.i.b16 %v1877, %v1876
      %v1881 = vpack.i.b16 %v1710, %v1685
      %v1882 = vshrl.u32 %v1685, 16
      %v1883 = vshrl.u32 %v1710, 16
      %v1884 = vpack.i.b16 %v1883, %v1882
      %v1887 = vpack.i.b16 %v1714, %v1689
      %v1888 = vshrl.u32 %v1689, 16
      %v1889 = vshrl.u32 %v1714, 16
      %v1890 = vpack.i.b16 %v1889, %v1888
      %v1893 = vpack.i.b16 %v1758, %v1733
      %v1894 = vshrl.u32 %v1733, 16
      %v1895 = vshrl.u32 %v1758, 16
      %v1896 = vpack.i.b16 %v1895, %v1894
      %v1899 = vpack.i.b16 %v1760, %v1735
      %v1900 = vshrl.u32 %v1735, 16
      %v1901 = vshrl.u32 %v1760, 16
      %v1902 = vpack.i.b16 %v1901, %v1900
      %v1905 = vpack.i.b16 %v1764, %v1739
      %v1906 = vshrl.u32 %v1739, 16
      %v1907 = vshrl.u32 %v1764, 16
      %v1908 = vpack.i.b16 %v1907, %v1906
      %v1909 = vunpack.c.l.b16 %v1767
      %v1910 = vunpack.c.l.b16 %v1785
      %v1911 = vunpack.c.l.b16 %v1803
      %v1912 = vunpack.c.l.b16 %v1821
      %v1913 = vunpack.c.l.b16 %v1839
      %v1914 = vunpack.c.l.b16 %v1857
      %v1915 = vunpack.c.l.b16 %v1875
      %v1916 = vunpack.c.l.b16 %v1893
      %v1917 = vpack.c.b16 %v1910, %v1909
      %v1918 = vpack.c.b16 %v1912, %v1911
      %v1919 = vpack.c.b16 %v1914, %v1913
      %v1920 = vpack.c.b16 %v1916, %v1915
      %v1921 = vunpack.c.l.b16 %v1773
      %v1922 = vunpack.c.l.b16 %v1791
      %v1923 = vunpack.c.l.b16 %v1809
      %v1924 = vunpack.c.l.b16 %v1827
      %v1925 = vunpack.c.l.b16 %v1845
      %v1926 = vunpack.c.l.b16 %v1863
      %v1927 = vunpack.c.l.b16 %v1881
      %v1928 = vunpack.c.l.b16 %v1899
      %v1929 = vpack.c.b16 %v1922, %v1921
      %v1930 = vpack.c.b16 %v1924, %v1923
      %v1931 = vpack.c.b16 %v1926, %v1925
      %v1932 = vpack.c.b16 %v1928, %v1927
      %vm1933 = vcmask 130048
      %v1935 = vsel %vm1933, %v1917, 0
      %v1938 = vsel %vm1933, %v1918, 0
      %v1941 = vsel %vm1933, %v1919, 0
      %v1944 = vsel %vm1933, %v1920, 0
      %v1947 = vsel %vm1933, %v1929, 0
      %v1950 = vsel %vm1933, %v1930, 0
      %v1953 = vsel %vm1933, %v1931, 0
      %v1956 = vsel %vm1933, %v1932, 0
      %1958 = vmatpush.bf16.xpose.msra.mxu0 0
      %1959 = vmatpush.bf16.xpose.msra.mxu0 0
      %1960 = vmatpush.bf16.xpose.msra.mxu0 0
      %1961 = vmatpush.bf16.xpose.msra.mxu0 0
      %1962 = vmatpush.bf16.xpose.msra.mxu0 %v1956
      %1963 = vmatpush.bf16.xpose.msra.mxu0 %v1953
      %1964 = vmatpush.bf16.xpose.msra.mxu0 %v1950
      %1965 = vmatpush.bf16.xpose.msra.mxu0 %v1947
      %1966 = vmatmul.bf16.gmra.mxu0 %v1935
      %v1967 = vpop.f32.mrf.mxu0
      %v1968 = vadd.f32 0.0, %v1967
      %v1969 = vpop.f32.mrf.mxu0
      %v1970 = vadd.f32 0.0, %v1969
      %1971 = vmatmul.bf16.gmra.mxu0 %v1938
      %v1972 = vpop.f32.mrf.mxu0
      %v1973 = vadd.f32 0.0, %v1972
      %v1974 = vpop.f32.mrf.mxu0
      %v1975 = vadd.f32 0.0, %v1974
      %1976 = vmatmul.bf16.gmra.mxu0 %v1941
      %v1977 = vpop.f32.mrf.mxu0
      %v1978 = vadd.f32 0.0, %v1977
      %v1979 = vpop.f32.mrf.mxu0
      %v1980 = vadd.f32 0.0, %v1979
      %1981 = vmatmul.bf16.gmra.mxu0 %v1944
      %v1982 = vpop.f32.mrf.mxu0
      %v1983 = vadd.f32 0.0, %v1982
      %v1984 = vpop.f32.mrf.mxu0
      %v1985 = vadd.f32 0.0, %v1984
      %1986 = vdwg.mxu0
      %v1987 = vunpack.c.l.b16 %v1770
      %v1988 = vunpack.c.l.b16 %v1788
      %v1989 = vunpack.c.l.b16 %v1806
      %v1990 = vunpack.c.l.b16 %v1824
      %v1991 = vunpack.c.l.b16 %v1842
      %v1992 = vunpack.c.l.b16 %v1860
      %v1993 = vunpack.c.l.b16 %v1878
      %v1994 = vunpack.c.l.b16 %v1896
      %v1995 = vpack.c.b16 %v1988, %v1987
      %v1996 = vpack.c.b16 %v1990, %v1989
      %v1997 = vpack.c.b16 %v1992, %v1991
      %v1998 = vpack.c.b16 %v1994, %v1993
      %v1999 = vunpack.c.l.b16 %v1776
      %v2000 = vunpack.c.l.b16 %v1794
      %v2001 = vunpack.c.l.b16 %v1812
      %v2002 = vunpack.c.l.b16 %v1830
      %v2003 = vunpack.c.l.b16 %v1848
      %v2004 = vunpack.c.l.b16 %v1866
      %v2005 = vunpack.c.l.b16 %v1884
      %v2006 = vunpack.c.l.b16 %v1902
      %v2007 = vpack.c.b16 %v2000, %v1999
      %v2008 = vpack.c.b16 %v2002, %v2001
      %v2009 = vpack.c.b16 %v2004, %v2003
      %v2010 = vpack.c.b16 %v2006, %v2005
      %v2012 = vsel %vm1933, %v1995, 0
      %v2015 = vsel %vm1933, %v1996, 0
      %v2018 = vsel %vm1933, %v1997, 0
      %v2021 = vsel %vm1933, %v1998, 0
      %v2024 = vsel %vm1933, %v2007, 0
      %v2027 = vsel %vm1933, %v2008, 0
      %v2030 = vsel %vm1933, %v2009, 0
      %v2033 = vsel %vm1933, %v2010, 0
      %2035 = vmatpush.bf16.xpose.msra.mxu0 0
      %2036 = vmatpush.bf16.xpose.msra.mxu0 0
      %2037 = vmatpush.bf16.xpose.msra.mxu0 0
      %2038 = vmatpush.bf16.xpose.msra.mxu0 0
      %2039 = vmatpush.bf16.xpose.msra.mxu0 %v2033
      %2040 = vmatpush.bf16.xpose.msra.mxu0 %v2030
      %2041 = vmatpush.bf16.xpose.msra.mxu0 %v2027
      %2042 = vmatpush.bf16.xpose.msra.mxu0 %v2024
      %2043 = vmatmul.bf16.gmra.mxu0 %v2012
      %v2044 = vpop.f32.mrf.mxu0
      %v2045 = vadd.f32 0.0, %v2044
      %v2046 = vpop.f32.mrf.mxu0
      %v2047 = vadd.f32 0.0, %v2046
      %2048 = vmatmul.bf16.gmra.mxu0 %v2015
      %v2049 = vpop.f32.mrf.mxu0
      %v2050 = vadd.f32 0.0, %v2049
      %v2051 = vpop.f32.mrf.mxu0
      %v2052 = vadd.f32 0.0, %v2051
      %2053 = vmatmul.bf16.gmra.mxu0 %v2018
      %v2054 = vpop.f32.mrf.mxu0
      %v2055 = vadd.f32 0.0, %v2054
      %v2056 = vpop.f32.mrf.mxu0
      %v2057 = vadd.f32 0.0, %v2056
      %2058 = vmatmul.bf16.gmra.mxu0 %v2021
      %v2059 = vpop.f32.mrf.mxu0
      %v2060 = vadd.f32 0.0, %v2059
      %v2061 = vpop.f32.mrf.mxu0
      %v2062 = vadd.f32 0.0, %v2061
      %2063 = vdwg.mxu0
      %vm2064 = vcmask 523264
      %v2065 = vsel %vm2064, %v1968, -inf
      %2066 = vmax.xlane.f32.xlu0 %v2065
      %v2067 = vpop.xlane.xlu0 %2066
      %v2068 = vsel %vm2064, %v1970, -inf
      %2069 = vmax.xlane.f32.xlu0 %v2068
      %v2070 = vpop.xlane.xlu0 %2069
      %v2071 = vsel %vm2064, %v1973, -inf
      %2072 = vmax.xlane.f32.xlu0 %v2071
      %v2073 = vpop.xlane.xlu0 %2072
      %v2074 = vsel %vm2064, %v1975, -inf
      %2075 = vmax.xlane.f32.xlu0 %v2074
      %v2076 = vpop.xlane.xlu0 %2075
      %v2077 = vsel %vm2064, %v1978, -inf
      %2078 = vmax.xlane.f32.xlu0 %v2077
      %v2079 = vpop.xlane.xlu0 %2078
      %v2080 = vsel %vm2064, %v1980, -inf
      %2081 = vmax.xlane.f32.xlu0 %v2080
      %v2082 = vpop.xlane.xlu0 %2081
      %v2083 = vsel %vm2064, %v1983, -inf
      %2084 = vmax.xlane.f32.xlu0 %v2083
      %v2085 = vpop.xlane.xlu0 %2084
      %v2086 = vsel %vm2064, %v1985, -inf
      %2087 = vmax.xlane.f32.xlu0 %v2086
      %v2088 = vpop.xlane.xlu0 %2087
      %v2089 = vsel %vm2064, %v2045, -inf
      %2090 = vmax.xlane.f32.xlu0 %v2089
      %v2091 = vpop.xlane.xlu0 %2090
      %v2092 = vsel %vm2064, %v2047, -inf
      %2093 = vmax.xlane.f32.xlu0 %v2092
      %v2094 = vpop.xlane.xlu0 %2093
      %v2095 = vsel %vm2064, %v2050, -inf
      %2096 = vmax.xlane.f32.xlu0 %v2095
      %v2097 = vpop.xlane.xlu0 %2096
      %v2098 = vsel %vm2064, %v2052, -inf
      %2099 = vmax.xlane.f32.xlu0 %v2098
      %v2100 = vpop.xlane.xlu0 %2099
      %v2101 = vsel %vm2064, %v2055, -inf
      %2102 = vmax.xlane.f32.xlu0 %v2101
      %v2103 = vpop.xlane.xlu0 %2102
      %v2104 = vsel %vm2064, %v2057, -inf
      %2105 = vmax.xlane.f32.xlu0 %v2104
      %v2106 = vpop.xlane.xlu0 %2105
      %v2107 = vsel %vm2064, %v2060, -inf
      %2108 = vmax.xlane.f32.xlu0 %v2107
      %v2109 = vpop.xlane.xlu0 %2108
      %v2110 = vsel %vm2064, %v2062, -inf
      %2111 = vmax.xlane.f32.xlu0 %v2110
      %v2112 = vpop.xlane.xlu0 %2111
      %v2113 = vsub.f32 %v1968, %v2067
      %v2114 = vsub.f32 %v1970, %v2070
      %v2115 = vsub.f32 %v1973, %v2073
      %v2116 = vsub.f32 %v1975, %v2076
      %v2117 = vsub.f32 %v1978, %v2079
      %v2118 = vsub.f32 %v1980, %v2082
      %v2119 = vsub.f32 %v1983, %v2085
      %v2120 = vsub.f32 %v1985, %v2088
      %v2121 = vsub.f32 %v2045, %v2091
      %v2122 = vsub.f32 %v2047, %v2094
      %v2123 = vsub.f32 %v2050, %v2097
      %v2124 = vsub.f32 %v2052, %v2100
      %v2125 = vsub.f32 %v2055, %v2103
      %v2126 = vsub.f32 %v2057, %v2106
      %v2127 = vsub.f32 %v2060, %v2109
      %v2128 = vsub.f32 %v2062, %v2112
      %v2129 = vmul.f32 %v2113, 1.442695
      %v2130 = vpow.pop %v2129
      %v2131 = vmul.f32 %v2114, 1.442695
      %v2132 = vpow.pop %v2131
      %v2133 = vmul.f32 %v2115, 1.442695
      %v2134 = vpow.pop %v2133
      %v2135 = vmul.f32 %v2116, 1.442695
      %v2136 = vpow.pop %v2135
      %v2137 = vmul.f32 %v2117, 1.442695
      %v2138 = vpow.pop %v2137
      %v2139 = vmul.f32 %v2118, 1.442695
      %v2140 = vpow.pop %v2139
      %v2141 = vmul.f32 %v2119, 1.442695
      %v2142 = vpow.pop %v2141
      %v2143 = vmul.f32 %v2120, 1.442695
      %v2144 = vpow.pop %v2143
      %v2145 = vmul.f32 %v2121, 1.442695
      %v2146 = vpow.pop %v2145
      %v2147 = vmul.f32 %v2122, 1.442695
      %v2148 = vpow.pop %v2147
      %v2149 = vmul.f32 %v2123, 1.442695
      %v2150 = vpow.pop %v2149
      %v2151 = vmul.f32 %v2124, 1.442695
      %v2152 = vpow.pop %v2151
      %v2153 = vmul.f32 %v2125, 1.442695
      %v2154 = vpow.pop %v2153
      %v2155 = vmul.f32 %v2126, 1.442695
      %v2156 = vpow.pop %v2155
      %v2157 = vmul.f32 %v2127, 1.442695
      %v2158 = vpow.pop %v2157
      %v2159 = vmul.f32 %v2128, 1.442695
      %v2160 = vpow.pop %v2159
      %v2161 = vsel %vm2064, %v2130, 0.0
      %2162 = vadd.xlane.f32.xlu0 %v2161
      %v2163 = vpop.xlane.xlu0 %2162
      %v2164 = vsel %vm2064, %v2132, 0.0
      %2165 = vadd.xlane.f32.xlu0 %v2164
      %v2166 = vpop.xlane.xlu0 %2165
      %v2167 = vsel %vm2064, %v2134, 0.0
      %2168 = vadd.xlane.f32.xlu0 %v2167
      %v2169 = vpop.xlane.xlu0 %2168
      %v2170 = vsel %vm2064, %v2136, 0.0
      %2171 = vadd.xlane.f32.xlu0 %v2170
      %v2172 = vpop.xlane.xlu0 %2171
      %v2173 = vsel %vm2064, %v2138, 0.0
      %2174 = vadd.xlane.f32.xlu0 %v2173
      %v2175 = vpop.xlane.xlu0 %2174
      %v2176 = vsel %vm2064, %v2140, 0.0
      %2177 = vadd.xlane.f32.xlu0 %v2176
      %v2178 = vpop.xlane.xlu0 %2177
      %v2179 = vsel %vm2064, %v2142, 0.0
      %2180 = vadd.xlane.f32.xlu0 %v2179
      %v2181 = vpop.xlane.xlu0 %2180
      %v2182 = vsel %vm2064, %v2144, 0.0
      %2183 = vadd.xlane.f32.xlu0 %v2182
      %v2184 = vpop.xlane.xlu0 %2183
      %v2185 = vsel %vm2064, %v2146, 0.0
      %2186 = vadd.xlane.f32.xlu0 %v2185
      %v2187 = vpop.xlane.xlu0 %2186
      %v2188 = vsel %vm2064, %v2148, 0.0
      %2189 = vadd.xlane.f32.xlu0 %v2188
      %v2190 = vpop.xlane.xlu0 %2189
      %v2191 = vsel %vm2064, %v2150, 0.0
      %2192 = vadd.xlane.f32.xlu0 %v2191
      %v2193 = vpop.xlane.xlu0 %2192
      %v2194 = vsel %vm2064, %v2152, 0.0
      %2195 = vadd.xlane.f32.xlu0 %v2194
      %v2196 = vpop.xlane.xlu0 %2195
      %v2197 = vsel %vm2064, %v2154, 0.0
      %2198 = vadd.xlane.f32.xlu0 %v2197
      %v2199 = vpop.xlane.xlu0 %2198
      %v2200 = vsel %vm2064, %v2156, 0.0
      %2201 = vadd.xlane.f32.xlu0 %v2200
      %v2202 = vpop.xlane.xlu0 %2201
      %v2203 = vsel %vm2064, %v2158, 0.0
      %2204 = vadd.xlane.f32.xlu0 %v2203
      %v2205 = vpop.xlane.xlu0 %2204
      %v2206 = vsel %vm2064, %v2160, 0.0
      %2207 = vadd.xlane.f32.xlu0 %v2206
      %v2208 = vpop.xlane.xlu0 %2207
      %v2209 = vpack.c.bf16 %v2130, %v2130
      %v2210 = vpack.c.bf16 %v2132, %v2132
      %v2211 = vpack.c.bf16 %v2134, %v2134
      %v2212 = vpack.c.bf16 %v2136, %v2136
      %v2213 = vpack.c.bf16 %v2138, %v2138
      %v2214 = vpack.c.bf16 %v2140, %v2140
      %v2215 = vpack.c.bf16 %v2142, %v2142
      %v2216 = vpack.c.bf16 %v2144, %v2144
      %v2217 = vpack.c.bf16 %v2146, %v2146
      %v2218 = vpack.c.bf16 %v2148, %v2148
      %v2219 = vpack.c.bf16 %v2150, %v2150
      %v2220 = vpack.c.bf16 %v2152, %v2152
      %v2221 = vpack.c.bf16 %v2154, %v2154
      %v2222 = vpack.c.bf16 %v2156, %v2156
      %v2223 = vpack.c.bf16 %v2158, %v2158
      %v2224 = vpack.c.bf16 %v2160, %v2160
      %v2233 = vunpack.c.l.b16 %v2209
      %v2234 = vunpack.c.l.b16 %v2210
      %v2235 = vunpack.c.l.b16 %v2211
      %v2236 = vunpack.c.l.b16 %v2212
      %v2237 = vunpack.c.l.b16 %v2213
      %v2238 = vunpack.c.l.b16 %v2214
      %v2239 = vunpack.c.l.b16 %v2215
      %v2240 = vunpack.c.l.b16 %v2216
      %v2241 = vpack.c.b16 %v2234, %v2233
      %v2242 = vpack.c.b16 %v2236, %v2235
      %v2243 = vpack.c.b16 %v2238, %v2237
      %v2244 = vpack.c.b16 %v2240, %v2239
      %v2245 = vunpack.c.l.b16 %v1779
      %v2246 = vunpack.c.l.b16 %v1797
      %v2247 = vunpack.c.l.b16 %v1815
      %v2248 = vunpack.c.l.b16 %v1833
      %v2249 = vunpack.c.l.b16 %v1851
      %v2250 = vunpack.c.l.b16 %v1869
      %v2251 = vunpack.c.l.b16 %v1887
      %v2252 = vunpack.c.l.b16 %v1905
      %v2253 = vpack.c.b16 %v2246, %v2245
      %v2254 = vpack.c.b16 %v2248, %v2247
      %v2255 = vpack.c.b16 %v2250, %v2249
      %v2256 = vpack.c.b16 %v2252, %v2251
      %v2262 = vsel %vm2064, %v2241, 0
      %v2265 = vsel %vm2064, %v2242, 0
      %v2268 = vsel %vm2064, %v2243, 0
      %v2271 = vsel %vm2064, %v2244, 0
      %2273 = vmatpush.bf16.msra.mxu0 0
      %2274 = vmatpush.bf16.msra.mxu0 0
      %2275 = vmatpush.bf16.msra.mxu0 0
      %2276 = vmatpush.bf16.msra.mxu0 0
      %2277 = vmatpush.bf16.msra.mxu0 %v2256
      %2278 = vmatpush.bf16.msra.mxu0 %v2255
      %2279 = vmatpush.bf16.msra.mxu0 %v2254
      %2280 = vmatpush.bf16.msra.mxu0 %v2253
      %2281 = vmatmul.bf16.gmra.mxu0 %v2262
      %v2282 = vpop.f32.mrf.mxu0
      %v2283 = vadd.f32 0.0, %v2282
      %v2284 = vpop.f32.mrf.mxu0
      %v2285 = vadd.f32 0.0, %v2284
      %2286 = vmatmul.bf16.gmra.mxu0 %v2265
      %v2287 = vpop.f32.mrf.mxu0
      %v2288 = vadd.f32 0.0, %v2287
      %v2289 = vpop.f32.mrf.mxu0
      %v2290 = vadd.f32 0.0, %v2289
      %2291 = vmatmul.bf16.gmra.mxu0 %v2268
      %v2292 = vpop.f32.mrf.mxu0
      %v2293 = vadd.f32 0.0, %v2292
      %v2294 = vpop.f32.mrf.mxu0
      %v2295 = vadd.f32 0.0, %v2294
      %2296 = vmatmul.bf16.gmra.mxu0 %v2271
      %v2297 = vpop.f32.mrf.mxu0
      %v2298 = vadd.f32 0.0, %v2297
      %v2299 = vpop.f32.mrf.mxu0
      %v2300 = vadd.f32 0.0, %v2299
      %2301 = vdwg.mxu0
      %v2310 = vunpack.c.l.b16 %v2217
      %v2311 = vunpack.c.l.b16 %v2218
      %v2312 = vunpack.c.l.b16 %v2219
      %v2313 = vunpack.c.l.b16 %v2220
      %v2314 = vunpack.c.l.b16 %v2221
      %v2315 = vunpack.c.l.b16 %v2222
      %v2316 = vunpack.c.l.b16 %v2223
      %v2317 = vunpack.c.l.b16 %v2224
      %v2318 = vpack.c.b16 %v2311, %v2310
      %v2319 = vpack.c.b16 %v2313, %v2312
      %v2320 = vpack.c.b16 %v2315, %v2314
      %v2321 = vpack.c.b16 %v2317, %v2316
      %v2322 = vunpack.c.l.b16 %v1782
      %v2323 = vunpack.c.l.b16 %v1800
      %v2324 = vunpack.c.l.b16 %v1818
      %v2325 = vunpack.c.l.b16 %v1836
      %v2326 = vunpack.c.l.b16 %v1854
      %v2327 = vunpack.c.l.b16 %v1872
      %v2328 = vunpack.c.l.b16 %v1890
      %v2329 = vunpack.c.l.b16 %v1908
      %v2330 = vpack.c.b16 %v2323, %v2322
      %v2331 = vpack.c.b16 %v2325, %v2324
      %v2332 = vpack.c.b16 %v2327, %v2326
      %v2333 = vpack.c.b16 %v2329, %v2328
      %v2339 = vsel %vm2064, %v2318, 0
      %v2342 = vsel %vm2064, %v2319, 0
      %v2345 = vsel %vm2064, %v2320, 0
      %v2348 = vsel %vm2064, %v2321, 0
      %2350 = vmatpush.bf16.msra.mxu0 0
      %2351 = vmatpush.bf16.msra.mxu0 0
      %2352 = vmatpush.bf16.msra.mxu0 0
      %2353 = vmatpush.bf16.msra.mxu0 0
      %2354 = vmatpush.bf16.msra.mxu0 %v2333
      %2355 = vmatpush.bf16.msra.mxu0 %v2332
      %2356 = vmatpush.bf16.msra.mxu0 %v2331
      %2357 = vmatpush.bf16.msra.mxu0 %v2330
      %2358 = vmatmul.bf16.gmra.mxu0 %v2339
      %v2359 = vpop.f32.mrf.mxu0
      %v2360 = vadd.f32 0.0, %v2359
      %v2361 = vpop.f32.mrf.mxu0
      %v2362 = vadd.f32 0.0, %v2361
      %2363 = vmatmul.bf16.gmra.mxu0 %v2342
      %v2364 = vpop.f32.mrf.mxu0
      %v2365 = vadd.f32 0.0, %v2364
      %v2366 = vpop.f32.mrf.mxu0
      %v2367 = vadd.f32 0.0, %v2366
      %2368 = vmatmul.bf16.gmra.mxu0 %v2345
      %v2369 = vpop.f32.mrf.mxu0
      %v2370 = vadd.f32 0.0, %v2369
      %v2371 = vpop.f32.mrf.mxu0
      %v2372 = vadd.f32 0.0, %v2371
      %2373 = vmatmul.bf16.gmra.mxu0 %v2348
      %v2374 = vpop.f32.mrf.mxu0
      %v2375 = vadd.f32 0.0, %v2374
      %v2376 = vpop.f32.mrf.mxu0
      %v2377 = vadd.f32 0.0, %v2376
      %2378 = vdwg.mxu0
      %v2379 = vrcp.pop %v2163
      %v2380 = vrcp.pop %v2166
      %v2381 = vrcp.pop %v2169
      %v2382 = vrcp.pop %v2172
      %v2383 = vrcp.pop %v2175
      %v2384 = vrcp.pop %v2178
      %v2385 = vrcp.pop %v2181
      %v2386 = vrcp.pop %v2184
      %v2387 = vrcp.pop %v2187
      %v2388 = vrcp.pop %v2190
      %v2389 = vrcp.pop %v2193
      %v2390 = vrcp.pop %v2196
      %v2391 = vrcp.pop %v2199
      %v2392 = vrcp.pop %v2202
      %v2393 = vrcp.pop %v2205
      %v2394 = vrcp.pop %v2208
      %v2395 = vmul.f32 %v2283, %v2379
      %v2396 = vmul.f32 %v2285, %v2380
      %v2397 = vmul.f32 %v2288, %v2381
      %v2398 = vmul.f32 %v2290, %v2382
      %v2399 = vmul.f32 %v2293, %v2383
      %v2400 = vmul.f32 %v2295, %v2384
      %v2401 = vmul.f32 %v2298, %v2385
      %v2402 = vmul.f32 %v2300, %v2386
      %v2403 = vmul.f32 %v2360, %v2387
      %v2404 = vmul.f32 %v2362, %v2388
      %v2405 = vmul.f32 %v2365, %v2389
      %v2406 = vmul.f32 %v2367, %v2390
      %v2407 = vmul.f32 %v2370, %v2391
      %v2408 = vmul.f32 %v2372, %v2392
      %v2409 = vmul.f32 %v2375, %v2393
      %v2410 = vmul.f32 %v2377, %v2394
      %v2411 = vpack.c.bf16 %v2395, %v2395
      %v2412 = vpack.c.bf16 %v2396, %v2396
      %v2413 = vpack.c.bf16 %v2397, %v2397
      %v2414 = vpack.c.bf16 %v2398, %v2398
      %v2415 = vpack.c.bf16 %v2399, %v2399
      %v2416 = vpack.c.bf16 %v2400, %v2400
      %v2417 = vpack.c.bf16 %v2401, %v2401
      %v2418 = vpack.c.bf16 %v2402, %v2402
      %v2419 = vpack.c.bf16 %v2403, %v2403
      %v2420 = vpack.c.bf16 %v2404, %v2404
      %v2421 = vpack.c.bf16 %v2405, %v2405
      %v2422 = vpack.c.bf16 %v2406, %v2406
      %v2423 = vpack.c.bf16 %v2407, %v2407
      %v2424 = vpack.c.bf16 %v2408, %v2408
      %v2425 = vpack.c.bf16 %v2409, %v2409
      %v2426 = vpack.c.bf16 %v2410, %v2410
      %v2427 = vld [vmem:[%s2] sm:$0xf]
      %v2428 = vld [vmem:[%s2 + $0x4] sm:$0xf]
      %v2429 = vld [vmem:[%s2 + $0x8] sm:$0xf]
      %v2430 = vld [vmem:[%s2 + $0xc] sm:$0xf]
      %v2439 = vunpack.c.l.b16 %v2411
      %v2440 = vunpack.c.l.b16 %v2412
      %v2441 = vunpack.c.l.b16 %v2413
      %v2442 = vunpack.c.l.b16 %v2414
      %v2443 = vunpack.c.l.b16 %v2415
      %v2444 = vunpack.c.l.b16 %v2416
      %v2445 = vunpack.c.l.b16 %v2417
      %v2446 = vunpack.c.l.b16 %v2418
      %v2447 = vpack.c.b16 %v2440, %v2439
      %v2448 = vpack.c.b16 %v2442, %v2441
      %v2449 = vpack.c.b16 %v2444, %v2443
      %v2450 = vpack.c.b16 %v2446, %v2445
      %v2453 = vunpack.c.l.b16 %v2427
      %v2454 = vunpack.c.l.b16 %v2428
      %v2455 = vpack.c.b16 %v2454, %v2453
      %v2458 = vsel %vm1933, %v2447, 0
      %v2461 = vsel %vm1933, %v2448, 0
      %v2464 = vsel %vm1933, %v2449, 0
      %v2467 = vsel %vm1933, %v2450, 0
      %2469 = vmatpush.bf16.msra.mxu0 0
      %2470 = vmatpush.bf16.msra.mxu0 0
      %2471 = vmatpush.bf16.msra.mxu0 0
      %2472 = vmatpush.bf16.msra.mxu0 0
      %2473 = vmatpush.bf16.msra.mxu0 0
      %2474 = vmatpush.bf16.msra.mxu0 0
      %2475 = vmatpush.bf16.msra.mxu0 0
      %2476 = vmatpush.bf16.msra.mxu0 %v2455
      %2477 = vmatmul.bf16.gmra.mxu0 %v2458
      %v2478 = vpop.f32.mrf.mxu0
      %v2479 = vadd.f32 0.0, %v2478
      %v2480 = vpop.f32.mrf.mxu0
      %v2481 = vadd.f32 0.0, %v2480
      %2482 = vmatmul.bf16.gmra.mxu0 %v2461
      %v2483 = vpop.f32.mrf.mxu0
      %v2484 = vadd.f32 0.0, %v2483
      %v2485 = vpop.f32.mrf.mxu0
      %v2486 = vadd.f32 0.0, %v2485
      %2487 = vmatmul.bf16.gmra.mxu0 %v2464
      %v2488 = vpop.f32.mrf.mxu0
      %v2489 = vadd.f32 0.0, %v2488
      %v2490 = vpop.f32.mrf.mxu0
      %v2491 = vadd.f32 0.0, %v2490
      %2492 = vmatmul.bf16.gmra.mxu0 %v2467
      %v2493 = vpop.f32.mrf.mxu0
      %v2494 = vadd.f32 0.0, %v2493
      %v2495 = vpop.f32.mrf.mxu0
      %v2496 = vadd.f32 0.0, %v2495
      %2497 = vdwg.mxu0
      %v2506 = vunpack.c.l.b16 %v2419
      %v2507 = vunpack.c.l.b16 %v2420
      %v2508 = vunpack.c.l.b16 %v2421
      %v2509 = vunpack.c.l.b16 %v2422
      %v2510 = vunpack.c.l.b16 %v2423
      %v2511 = vunpack.c.l.b16 %v2424
      %v2512 = vunpack.c.l.b16 %v2425
      %v2513 = vunpack.c.l.b16 %v2426
      %v2514 = vpack.c.b16 %v2507, %v2506
      %v2515 = vpack.c.b16 %v2509, %v2508
      %v2516 = vpack.c.b16 %v2511, %v2510
      %v2517 = vpack.c.b16 %v2513, %v2512
      %v2520 = vunpack.c.l.b16 %v2429
      %v2521 = vunpack.c.l.b16 %v2430
      %v2522 = vpack.c.b16 %v2521, %v2520
      %v2525 = vsel %vm1933, %v2514, 0
      %v2528 = vsel %vm1933, %v2515, 0
      %v2531 = vsel %vm1933, %v2516, 0
      %v2534 = vsel %vm1933, %v2517, 0
      %2536 = vmatpush.bf16.msra.mxu0 0
      %2537 = vmatpush.bf16.msra.mxu0 0
      %2538 = vmatpush.bf16.msra.mxu0 0
      %2539 = vmatpush.bf16.msra.mxu0 0
      %2540 = vmatpush.bf16.msra.mxu0 0
      %2541 = vmatpush.bf16.msra.mxu0 0
      %2542 = vmatpush.bf16.msra.mxu0 0
      %2543 = vmatpush.bf16.msra.mxu0 %v2522
      %2544 = vmatmul.bf16.gmra.mxu0 %v2525
      %v2545 = vpop.f32.mrf.mxu0
      %v2546 = vadd.f32 0.0, %v2545
      %v2547 = vpop.f32.mrf.mxu0
      %v2548 = vadd.f32 0.0, %v2547
      %2549 = vmatmul.bf16.gmra.mxu0 %v2528
      %v2550 = vpop.f32.mrf.mxu0
      %v2551 = vadd.f32 0.0, %v2550
      %v2552 = vpop.f32.mrf.mxu0
      %v2553 = vadd.f32 0.0, %v2552
      %2554 = vmatmul.bf16.gmra.mxu0 %v2531
      %v2555 = vpop.f32.mrf.mxu0
      %v2556 = vadd.f32 0.0, %v2555
      %v2557 = vpop.f32.mrf.mxu0
      %v2558 = vadd.f32 0.0, %v2557
      %2559 = vmatmul.bf16.gmra.mxu0 %v2534
      %v2560 = vpop.f32.mrf.mxu0
      %v2561 = vadd.f32 0.0, %v2560
      %v2562 = vpop.f32.mrf.mxu0
      %v2563 = vadd.f32 0.0, %v2562
      %2564 = vdwg.mxu0
      %v2565 = vsel %vm288, %v2479, 0.0
      %v2566 = vsel %vm288, %v2546, 0.0
      %v2567 = vadd.f32 %v2565, %v2566
      %v2568 = vsel %vm288, %v2481, 0.0
      %v2569 = vsel %vm288, %v2548, 0.0
      %v2570 = vadd.f32 %v2568, %v2569
      %v2571 = vsel %vm288, %v2484, 0.0
      %v2572 = vsel %vm288, %v2551, 0.0
      %v2573 = vadd.f32 %v2571, %v2572
      %v2574 = vsel %vm288, %v2486, 0.0
      %v2575 = vsel %vm288, %v2553, 0.0
      %v2576 = vadd.f32 %v2574, %v2575
      %v2577 = vsel %vm288, %v2489, 0.0
      %v2578 = vsel %vm288, %v2556, 0.0
      %v2579 = vadd.f32 %v2577, %v2578
      %v2580 = vsel %vm288, %v2491, 0.0
      %v2581 = vsel %vm288, %v2558, 0.0
      %v2582 = vadd.f32 %v2580, %v2581
      %v2583 = vsel %vm288, %v2494, 0.0
      %v2584 = vsel %vm288, %v2561, 0.0
      %v2585 = vadd.f32 %v2583, %v2584
      %v2586 = vsel %vm288, %v2496, 0.0
      %v2587 = vsel %vm288, %v2563, 0.0
      %v2588 = vadd.f32 %v2586, %v2587
      %v2589 = vld [vmem:[%s3] sm:$0x1]
      %v2591 = vperm.slane %v2589, 0
      %v2593 = vadd.f32 %v2567, %v2591
      %v2594 = vadd.f32 %v2570, %v2591
      %v2595 = vadd.f32 %v2573, %v2591
      %v2596 = vadd.f32 %v2576, %v2591
      %v2597 = vadd.f32 %v2579, %v2591
      %v2598 = vadd.f32 %v2582, %v2591
      %v2599 = vadd.f32 %v2585, %v2591
      %v2600 = vadd.f32 %v2588, %v2591
      %v2601 = vadd.f32 %v2593, %v280
      %v2602 = vadd.f32 %v2594, %v281
      %v2603 = vadd.f32 %v2595, %v282
      %v2604 = vadd.f32 %v2596, %v283
      %v2605 = vadd.f32 %v2597, %v284
      %v2606 = vadd.f32 %v2598, %v285
      %v2607 = vadd.f32 %v2599, %v286
      %v2608 = vadd.f32 %v2600, %v287
      %2609 = vst.msk [vmem:[%s278] sm:$0xff] %vm288, %v2601
      %2610 = vst.msk [vmem:[%s278 + $0x8] sm:$0xff] %vm288, %v2602
      %2611 = vst.msk [vmem:[%s278 + $0x10] sm:$0xff] %vm288, %v2603
      %2612 = vst.msk [vmem:[%s278 + $0x18] sm:$0xff] %vm288, %v2604
      %2613 = vst.msk [vmem:[%s278 + $0x20] sm:$0xff] %vm288, %v2605
      %2614 = vst.msk [vmem:[%s278 + $0x28] sm:$0xff] %vm288, %v2606
      %2615 = vst.msk [vmem:[%s278 + $0x30] sm:$0xff] %vm288, %v2607
      %2616 = vst.msk [vmem:[%s278 + $0x38] sm:$0xff] %vm288, %v2608
      %p2617 = scmp.lt.s32.totalorder %s18, 1
      %s2618 = scalar_select %p2617, %s18, 1
      %s2619 = smul.addr %s2618, 8
      %s2620 = smul.addr %s2619, 8
      %s2621 = scalar_lea.vmem %s7, %s2620
      // Predicated region
      $region49: #{tpu_custom_call.1} parent=47 // pred_check
        %p2622 = pneg %p188
      $region50: #{tpu_custom_call.1} parent=47 // pred_check_branch
        %2624 = sbr.rel (%p2622) target = $region52
      $region51: #{tpu_custom_call.1} parent=47 // pred_region
        _
      $region52: #{tpu_custom_call.1} parent=47 // pred_fallthru
        _
    $region48: #{tpu_custom_call.1} parent=5 // pred_fallthru
      _
    %p2625 = scmp.le.s32.totalorder 2, %s13
    // Predicated region
    $region53: #{tpu_custom_call.1} parent=5 // pred_check
      %p2626 = pneg %p2625
    $region54: #{tpu_custom_call.1} parent=5 // pred_check_branch
      %2628 = sbr.rel (%p2626) target = $region56
    $region55: #{tpu_custom_call.1} parent=5 // pred_region
      %s2629 = ssub.s32 %s13, 2
      // Predicated region
      $region57: #{tpu_custom_call.1} parent=55 // pred_check
        %p2630 = pneg %p194
      $region58: #{tpu_custom_call.1} parent=55 // pred_check_branch
        %2632 = sbr.rel (%p2630) target = $region60
      $region59: #{tpu_custom_call.1} parent=55 // pred_region
        %p2633 = scmp.lt.s32.totalorder %s19, 1
        %s2634 = scalar_select %p2633, %s19, 1
        %s2635 = smul.addr %s2634, 8
        %s2636 = smul.addr %s2635, 8
        %s2637 = scalar_lea.vmem %s7, %s2636
      $region60: #{tpu_custom_call.1} parent=55 // pred_fallthru
        _
    $region56: #{tpu_custom_call.1} parent=5 // pred_fallthru
      _
  $region6: #{tpu_custom_call.1} parent=0 // loop_footer
    %s17 = sadd.s32 1, %s13
  $region7: #{tpu_custom_call.1} parent=0 // loop_footer_branch
    %12 = sbr.rel target = $region3
  $region8: #{tpu_custom_call.1} parent=0 // loop_exit
    _

</llo_original>
